<compile_context>
chip_gen: v5e
topology: v5e:2x2
jax: 0.10.0
libtpu: 0.0.40
codegen_flags: <defaults>
</compile_context>

<pallas_src>
import jax
import jax.numpy as jnp
from jax.experimental import pallas as pl
from jax.experimental.pallas import tpu as pltpu


def _relu_conv1x1_kernel(x_ref, w_ref, o_ref):
    # x_ref: (1, Cin, HW) f32   w_ref: (tile_cout, Cin) bf16   o_ref: (1, tile_cout, HW)
    # Fused ReLU on the VPU (f32), then cast to bf16 for the bf16-native MXU.
    x = jnp.maximum(x_ref[0], 0.0).astype(jnp.bfloat16)
    o_ref[0] = jnp.dot(
        w_ref[...], x, preferred_element_type=jnp.float32
    ).astype(o_ref.dtype)                                   # (tile_cout, HW) on the MXU


def _default_tile_cout(cout: int) -> int:
    """Per-generation cout tiling: 2 blocks on v7x (2 TCs), 1 block elsewhere."""
    kind = ""
    try:
        kind = jax.devices()[0].device_kind.lower()
    except Exception:
        pass
    if "v7" in kind and cout % 2 == 0:
        return cout // 2   # exactly 2 parallel grid blocks -> one per TensorCore
    return cout            # single-TC (v5e/v6e): one step per batch element


def relu_conv1x1(x_nchw: jax.Array, weight_oi: jax.Array, *, tile_cout: int | None = None) -> jax.Array:
    """x_nchw: (N, Cin, H, W), weight_oi: (Cout, Cin). Returns (N, Cout, H, W)."""
    N, Cin, H, W = x_nchw.shape
    Cout = weight_oi.shape[0]
    HW = H * W

    # Zero-copy views: no NCHW<->NHWC transposes, no extra HBM round trips.
    x3d = x_nchw.reshape(N, Cin, HW)
    # Weight cast once in the wrapper: bf16-native MXU + half the weight DMA bytes.
    w_bf16 = weight_oi.astype(jnp.bfloat16)

    if tile_cout is None:
        tile_cout = _default_tile_cout(Cout)
    # Guard: never silently collapse to a single block — round down to a divisor.
    tile_cout = max(1, min(tile_cout, Cout))
    while Cout % tile_cout != 0:
        tile_cout -= 1
    n_cout_blocks = Cout // tile_cout

    out_dtype = x_nchw.dtype
    flops = 2 * N * Cout * Cin * HW
    bytes_accessed = (
        N * Cin * HW * x_nchw.dtype.itemsize          # activations in
        + Cout * Cin * w_bf16.dtype.itemsize          # weights in (bf16)
        + N * Cout * HW * jnp.dtype(out_dtype).itemsize  # output writeback
    )

    out3d = pl.pallas_call(
        _relu_conv1x1_kernel,
        out_shape=jax.ShapeDtypeStruct((N, Cout, HW), out_dtype),
        grid=(N, n_cout_blocks),
        in_specs=[
            # Activation tile: full channel/pixel slab for batch n; stays
            # resident across the inner cout loop (same block index).
            pl.BlockSpec((1, Cin, HW), lambda n, c: (n, 0, 0)),
            # Weight tile: tile_cout output channels x all input channels.
            pl.BlockSpec((tile_cout, Cin), lambda n, c: (c, 0)),
        ],
        out_specs=pl.BlockSpec((1, tile_cout, HW), lambda n, c: (n, c, 0)),
        compiler_params=pltpu.CompilerParams(
            # Both grid axes are fully independent -> allow cross-TC sharding (v7x).
            dimension_semantics=("parallel", "parallel"),
        ),
        cost_estimate=pl.CostEstimate(
            flops=flops, transcendentals=0, bytes_accessed=bytes_accessed
        ),
    )(x3d, w_bf16)

    # (N, Cout, HW) -> (N, Cout, H, W): contiguous reshape, zero-copy.
    return out3d.reshape(N, Cout, H, W)


if __name__ == "__main__":
    key = jax.random.PRNGKey(0)
    k_x, k_w = jax.random.split(key)

    # Shapes implied by the module's forward: x43 is (1, 128, 28, 28),
    # conv weight is (512, 128, 1, 1) -> stored here as (512, 128).
    N, Cin, H, W, Cout = 1, 128, 28, 28, 512
    x = jax.random.normal(k_x, (N, Cin, H, W), dtype=jnp.float32)
    weight = jax.random.normal(k_w, (Cout, Cin), dtype=jnp.float32) * 0.05

    out = relu_conv1x1(x, weight)
    out = jax.block_until_ready(out)
    assert out.shape == (N, Cout, H, W)
    assert out.dtype == x.dtype

    # Correctness checks.
    relu_x = jnp.maximum(x, 0.0)
    # (a) tight check vs a reference with the same bf16 operand rounding
    ref_bf16 = jnp.einsum(
        "nchw,oc->nohw",
        relu_x.astype(jnp.bfloat16).astype(jnp.float32),
        weight.astype(jnp.bfloat16).astype(jnp.float32),
    )
    assert jnp.allclose(out, ref_bf16, atol=1e-3, rtol=1e-3)
    # (b) looser check vs the full-f32 reference (bf16 operand rounding, K=128)
    ref_f32 = jnp.einsum("nchw,oc->nohw", relu_x, weight)
    assert jnp.allclose(out, ref_f32, atol=2e-2, rtol=2e-2)

    print("KERNEL_OK")
</pallas_src>

<mosaic_0001>
module attributes {stable_mosaic.version = 11 : i64} {
  func.func @_relu_conv1x1_kernel(%arg0: i32, %arg1: i32, %arg2: memref<1x128x784xf32, #tpu.memory_space<vmem>>, %arg3: memref<512x128xbf16, #tpu.memory_space<vmem>>, %arg4: memref<1x512x784xf32, #tpu.memory_space<vmem>>) attributes {dimension_semantics = [#tpu.dimension_semantics<parallel>, #tpu.dimension_semantics<parallel>], iteration_bounds = array<i64: 1, 1>, scalar_prefetch = 0 : i64, scratch_operands = 0 : i64, tpu.core_type = #tpu.core_type<tc>, window_params = [{transform_indices = @transform_0, window_bounds = array<i64: 1, 128, 784>}, {transform_indices = @transform_1, window_bounds = array<i64: 512, 128>}, {transform_indices = @transform_2, window_bounds = array<i64: 1, 512, 784>}]} {
    %c0 = arith.constant 0 : index
    %c0_0 = arith.constant 0 : index
    %c0_1 = arith.constant 0 : index
    %0 = vector.load %arg2[%c0, %c0_0, %c0_1] : memref<1x128x784xf32, #tpu.memory_space<vmem>>, vector<1x128x784xf32>
    %1 = vector.shape_cast %0 : vector<1x128x784xf32> to vector<128x784xf32>
    %cst = arith.constant 0.000000e+00 : f32
    %2 = vector.broadcast %cst : f32 to vector<128x784xf32>
    %3 = arith.maximumf %1, %2 : vector<128x784xf32>
    %4 = arith.truncf %3 : vector<128x784xf32> to vector<128x784xbf16>
    %c0_2 = arith.constant 0 : index
    %c0_3 = arith.constant 0 : index
    %5 = vector.load %arg3[%c0_2, %c0_3] : memref<512x128xbf16, #tpu.memory_space<vmem>>, vector<512x128xbf16>
    %cst_4 = arith.constant dense<0.000000e+00> : vector<512x784xf32>
    %6 = tpu.matmul %5, %4, %cst_4 {dimension_numbers = #tpu.dot_dimension_numbers<[1], [0], [0], [1], [0, 0, 1, 1], [], []>} : vector<512x128xbf16>, vector<128x784xbf16>, vector<512x784xf32> -> vector<512x784xf32>
    %c0_5 = arith.constant 0 : index
    %c0_6 = arith.constant 0 : index
    %c0_7 = arith.constant 0 : index
    %7 = vector.load %arg4[%c0_5, %c0_6, %c0_7] : memref<1x512x784xf32, #tpu.memory_space<vmem>>, vector<1x512x784xf32>
    %8 = vector.shape_cast %7 : vector<1x512x784xf32> to vector<512x784xf32>
    %9 = vector.shape_cast %6 : vector<512x784xf32> to vector<1x512x784xf32>
    tpu.vector_store %arg4[%c0_5, %c0_6, %c0_7], %9 {strides = array<i32>} : memref<1x512x784xf32, #tpu.memory_space<vmem>>, vector<1x512x784xf32>,
    return
  }
  func.func @transform_0(%arg0: i32, %arg1: i32) -> (i32, i32, i32) {
    %c0_i32 = arith.constant 0 : i32
    %c0_i32_0 = arith.constant 0 : i32
    %c0_i32_1 = arith.constant 0 : i32
    return %arg0, %c0_i32, %c0_i32_0 : i32, i32, i32
  }
  func.func @transform_1(%arg0: i32, %arg1: i32) -> (i32, i32) {
    %c0_i32 = arith.constant 0 : i32
    %c0_i32_0 = arith.constant 0 : i32
    return %arg1, %c0_i32 : i32, i32
  }
  func.func @transform_2(%arg0: i32, %arg1: i32) -> (i32, i32, i32) {
    %c0_i32 = arith.constant 0 : i32
    %c0_i32_0 = arith.constant 0 : i32
    return %arg0, %arg1, %c0_i32 : i32, i32, i32
  }
}

</mosaic_0001>

<llo_original>
// kernel: tpu_custom_call.1
$region0: #{tpu_custom_call.1}
  #allocation0 [shape = 'u32[]', space=smem, size = 0x4, offset = 0x4, fixed_abs, tag = 'smem constant byte address 0x4 - core index']
  #allocation1 [shape = 'u32[72,128]{1,0:T(1,128)}', space=vmem, size = 0x9000, scoped, tag = 'internal scratch']
  %s0 = inlined_call_operand.vmem [shape: f32[1,128,784], index: 0, kind: input, shape index: {}]
  %s1 = inlined_call_operand.hbm [shape: bf16[512,128], index: 1, kind: input, shape index: {}]
  %s2 = inlined_call_operand.vmem [shape: f32[1,512,784], index: 2, kind: output, shape index: {}]
  %s3 = sld [smem:[#allocation0]]
  $region22: #{tpu_custom_call.1} parent=0
    _
  %s5 = ssub.s32 1, %s3
  %s6 = scalar_select 0, %s5, %s3
  $region1: #{tpu_custom_call.1} parent=0
    #allocation2 [shape = 'u8[131072]{0}', space=vmem, size = 0x20000, scoped, tag = 'input window, operand 1, single buffered']
    #allocation3 [shape = 's32[1]{0}', space=sflag, size = 0x4, scoped, tag = 'scoped memory for tpu_custom_call.1']
    %7 = vsyncpa [#allocation3], 0
    // Predicated region
    $region2: #{tpu_custom_call.1} parent=1 // pred_check
      _
    $region3: #{tpu_custom_call.1} parent=1 // pred_check_branch
      %9 = sbr.rel (0) target = $region5
    $region4: #{tpu_custom_call.1} parent=1 // pred_region
      _
    $region5: #{tpu_custom_call.1} parent=1 // pred_fallthru
      _
    // Predicated region
    $region6: #{tpu_custom_call.1} parent=1 // pred_check
      _
    $region7: #{tpu_custom_call.1} parent=1 // pred_check_branch
      %11 = sbr.rel (0) target = $region9
    $region8: #{tpu_custom_call.1} parent=1 // pred_region
      %13 = vsyncadd [#allocation3], 0
      %s14 = sshll.u32 %s1, 4
      %s15 = int_to_ptr.hbm [resolvable:$true] %s14
      %s16 = sshll.u32 [#allocation2], 4
      %s17 = int_to_ptr.vmem [resolvable:$true] %s16
      %22 = dma.hbm_to_vmem [thread:$0]  %s15, 4096, %s17, [#allocation3], 64, 64, 4
    $region9: #{tpu_custom_call.1} parent=1 // pred_fallthru
      _
    // Predicated region
    $region10: #{tpu_custom_call.1} parent=1 // pred_check
      _
    $region11: #{tpu_custom_call.1} parent=1 // pred_check_branch
      %24 = sbr.rel (0) target = $region13
    $region12: #{tpu_custom_call.1} parent=1 // pred_region
      %26 = dma.done [#allocation3], 4096
    $region13: #{tpu_custom_call.1} parent=1 // pred_fallthru
      _
    %v27 = vld [vmem:[%s0] sm:$0xff]
    %v28 = vld [vmem:[%s0 + $0x8] sm:$0xff]
    %v29 = vld [vmem:[%s0 + $0x10] sm:$0xff]
    %v30 = vld [vmem:[%s0 + $0x18] sm:$0xff]
    %v31 = vld [vmem:[%s0 + $0x20] sm:$0xff]
    %v32 = vld [vmem:[%s0 + $0x28] sm:$0xff]
    %v33 = vld [vmem:[%s0 + $0x30] sm:$0xff]
    %v34 = vld [vmem:[%s0 + $0x38] sm:$0xff]
    %v35 = vld [vmem:[%s0 + $0x40] sm:$0xff]
    %v36 = vld [vmem:[%s0 + $0x48] sm:$0xff]
    %v37 = vld [vmem:[%s0 + $0x50] sm:$0xff]
    %v38 = vld [vmem:[%s0 + $0x58] sm:$0xff]
    %v39 = vld [vmem:[%s0 + $0x60] sm:$0xff]
    %v40 = vld [vmem:[%s0 + $0x68] sm:$0xff]
    %v41 = vld [vmem:[%s0 + $0x70] sm:$0xff]
    %v42 = vld [vmem:[%s0 + $0x78] sm:$0xff]
    %v43 = vld [vmem:[%s0 + $0x80] sm:$0xff]
    %v44 = vld [vmem:[%s0 + $0x88] sm:$0xff]
    %v45 = vld [vmem:[%s0 + $0x90] sm:$0xff]
    %v46 = vld [vmem:[%s0 + $0x98] sm:$0xff]
    %v47 = vld [vmem:[%s0 + $0xa0] sm:$0xff]
    %v48 = vld [vmem:[%s0 + $0xa8] sm:$0xff]
    %v49 = vld [vmem:[%s0 + $0xb0] sm:$0xff]
    %v50 = vld [vmem:[%s0 + $0xb8] sm:$0xff]
    %v51 = vld [vmem:[%s0 + $0xc0] sm:$0xff]
    %v52 = vld [vmem:[%s0 + $0xc8] sm:$0xff]
    %v53 = vld [vmem:[%s0 + $0xd0] sm:$0xff]
    %v54 = vld [vmem:[%s0 + $0xd8] sm:$0xff]
    %v55 = vld [vmem:[%s0 + $0xe0] sm:$0xff]
    %v56 = vld [vmem:[%s0 + $0xe8] sm:$0xff]
    %v57 = vld [vmem:[%s0 + $0xf0] sm:$0xff]
    %v58 = vld [vmem:[%s0 + $0xf8] sm:$0xff]
    %v59 = vld [vmem:[%s0 + $0x100] sm:$0xff]
    %v60 = vld [vmem:[%s0 + $0x108] sm:$0xff]
    %v61 = vld [vmem:[%s0 + $0x110] sm:$0xff]
    %v62 = vld [vmem:[%s0 + $0x118] sm:$0xff]
    %v63 = vld [vmem:[%s0 + $0x120] sm:$0xff]
    %v64 = vld [vmem:[%s0 + $0x128] sm:$0xff]
    %v65 = vld [vmem:[%s0 + $0x130] sm:$0xff]
    %v66 = vld [vmem:[%s0 + $0x138] sm:$0xff]
    %v67 = vld [vmem:[%s0 + $0x140] sm:$0xff]
    %v68 = vld [vmem:[%s0 + $0x148] sm:$0xff]
    %v69 = vld [vmem:[%s0 + $0x150] sm:$0xff]
    %v70 = vld [vmem:[%s0 + $0x158] sm:$0xff]
    %v71 = vld [vmem:[%s0 + $0x160] sm:$0xff]
    %v72 = vld [vmem:[%s0 + $0x168] sm:$0xff]
    %v73 = vld [vmem:[%s0 + $0x170] sm:$0xff]
    %v74 = vld [vmem:[%s0 + $0x178] sm:$0xff]
    %v75 = vld [vmem:[%s0 + $0x180] sm:$0xff]
    %v76 = vld [vmem:[%s0 + $0x188] sm:$0xff]
    %v77 = vld [vmem:[%s0 + $0x190] sm:$0xff]
    %v78 = vld [vmem:[%s0 + $0x198] sm:$0xff]
    %v79 = vld [vmem:[%s0 + $0x1a0] sm:$0xff]
    %v80 = vld [vmem:[%s0 + $0x1a8] sm:$0xff]
    %v81 = vld [vmem:[%s0 + $0x1b0] sm:$0xff]
    %v82 = vld [vmem:[%s0 + $0x1b8] sm:$0xff]
    %v83 = vld [vmem:[%s0 + $0x1c0] sm:$0xff]
    %v84 = vld [vmem:[%s0 + $0x1c8] sm:$0xff]
    %v85 = vld [vmem:[%s0 + $0x1d0] sm:$0xff]
    %v86 = vld [vmem:[%s0 + $0x1d8] sm:$0xff]
    %v87 = vld [vmem:[%s0 + $0x1e0] sm:$0xff]
    %v88 = vld [vmem:[%s0 + $0x1e8] sm:$0xff]
    %v89 = vld [vmem:[%s0 + $0x1f0] sm:$0xff]
    %v90 = vld [vmem:[%s0 + $0x1f8] sm:$0xff]
    %v91 = vld [vmem:[%s0 + $0x200] sm:$0xff]
    %v92 = vld [vmem:[%s0 + $0x208] sm:$0xff]
    %v93 = vld [vmem:[%s0 + $0x210] sm:$0xff]
    %v94 = vld [vmem:[%s0 + $0x218] sm:$0xff]
    %v95 = vld [vmem:[%s0 + $0x220] sm:$0xff]
    %v96 = vld [vmem:[%s0 + $0x228] sm:$0xff]
    %v97 = vld [vmem:[%s0 + $0x230] sm:$0xff]
    %v98 = vld [vmem:[%s0 + $0x238] sm:$0xff]
    %v99 = vld [vmem:[%s0 + $0x240] sm:$0xff]
    %v100 = vld [vmem:[%s0 + $0x248] sm:$0xff]
    %v101 = vld [vmem:[%s0 + $0x250] sm:$0xff]
    %v102 = vld [vmem:[%s0 + $0x258] sm:$0xff]
    %v103 = vld [vmem:[%s0 + $0x260] sm:$0xff]
    %v104 = vld [vmem:[%s0 + $0x268] sm:$0xff]
    %v105 = vld [vmem:[%s0 + $0x270] sm:$0xff]
    %v106 = vld [vmem:[%s0 + $0x278] sm:$0xff]
    %v107 = vld [vmem:[%s0 + $0x280] sm:$0xff]
    %v108 = vld [vmem:[%s0 + $0x288] sm:$0xff]
    %v109 = vld [vmem:[%s0 + $0x290] sm:$0xff]
    %v110 = vld [vmem:[%s0 + $0x298] sm:$0xff]
    %v111 = vld [vmem:[%s0 + $0x2a0] sm:$0xff]
    %v112 = vld [vmem:[%s0 + $0x2a8] sm:$0xff]
    %v113 = vld [vmem:[%s0 + $0x2b0] sm:$0xff]
    %v114 = vld [vmem:[%s0 + $0x2b8] sm:$0xff]
    %v115 = vld [vmem:[%s0 + $0x2c0] sm:$0xff]
    %v116 = vld [vmem:[%s0 + $0x2c8] sm:$0xff]
    %v117 = vld [vmem:[%s0 + $0x2d0] sm:$0xff]
    %v118 = vld [vmem:[%s0 + $0x2d8] sm:$0xff]
    %v119 = vld [vmem:[%s0 + $0x2e0] sm:$0xff]
    %v120 = vld [vmem:[%s0 + $0x2e8] sm:$0xff]
    %v121 = vld [vmem:[%s0 + $0x2f0] sm:$0xff]
    %v122 = vld [vmem:[%s0 + $0x2f8] sm:$0xff]
    %v123 = vld [vmem:[%s0 + $0x300] sm:$0xff]
    %v124 = vld [vmem:[%s0 + $0x308] sm:$0xff]
    %v125 = vld [vmem:[%s0 + $0x310] sm:$0xff]
    %v126 = vld [vmem:[%s0 + $0x318] sm:$0xff]
    %v127 = vld [vmem:[%s0 + $0x320] sm:$0xff]
    %v128 = vld [vmem:[%s0 + $0x328] sm:$0xff]
    %v129 = vld [vmem:[%s0 + $0x330] sm:$0xff]
    %v130 = vld [vmem:[%s0 + $0x338] sm:$0xff]
    %v131 = vld [vmem:[%s0 + $0x340] sm:$0xff]
    %v132 = vld [vmem:[%s0 + $0x348] sm:$0xff]
    %v133 = vld [vmem:[%s0 + $0x350] sm:$0xff]
    %v134 = vld [vmem:[%s0 + $0x358] sm:$0xff]
    %v135 = vld [vmem:[%s0 + $0x360] sm:$0xff]
    %v136 = vld [vmem:[%s0 + $0x368] sm:$0xff]
    %v137 = vld [vmem:[%s0 + $0x370] sm:$0xff]
    %v138 = vld [vmem:[%s0 + $0x378] sm:$0xff]
    %v139 = vmax.f32 %v27, 0.0
    %v140 = vmax.f32 %v28, 0.0
    %v141 = vmax.f32 %v29, 0.0
    %v142 = vmax.f32 %v30, 0.0
    %v143 = vmax.f32 %v31, 0.0
    %v144 = vmax.f32 %v32, 0.0
    %v145 = vmax.f32 %v33, 0.0
    %v146 = vmax.f32 %v34, 0.0
    %v147 = vmax.f32 %v35, 0.0
    %v148 = vmax.f32 %v36, 0.0
    %v149 = vmax.f32 %v37, 0.0
    %v150 = vmax.f32 %v38, 0.0
    %v151 = vmax.f32 %v39, 0.0
    %v152 = vmax.f32 %v40, 0.0
    %v153 = vmax.f32 %v41, 0.0
    %v154 = vmax.f32 %v42, 0.0
    %v155 = vmax.f32 %v43, 0.0
    %v156 = vmax.f32 %v44, 0.0
    %v157 = vmax.f32 %v45, 0.0
    %v158 = vmax.f32 %v46, 0.0
    %v159 = vmax.f32 %v47, 0.0
    %v160 = vmax.f32 %v48, 0.0
    %v161 = vmax.f32 %v49, 0.0
    %v162 = vmax.f32 %v50, 0.0
    %v163 = vmax.f32 %v51, 0.0
    %v164 = vmax.f32 %v52, 0.0
    %v165 = vmax.f32 %v53, 0.0
    %v166 = vmax.f32 %v54, 0.0
    %v167 = vmax.f32 %v55, 0.0
    %v168 = vmax.f32 %v56, 0.0
    %v169 = vmax.f32 %v57, 0.0
    %v170 = vmax.f32 %v58, 0.0
    %v171 = vmax.f32 %v59, 0.0
    %v172 = vmax.f32 %v60, 0.0
    %v173 = vmax.f32 %v61, 0.0
    %v174 = vmax.f32 %v62, 0.0
    %v175 = vmax.f32 %v63, 0.0
    %v176 = vmax.f32 %v64, 0.0
    %v177 = vmax.f32 %v65, 0.0
    %v178 = vmax.f32 %v66, 0.0
    %v179 = vmax.f32 %v67, 0.0
    %v180 = vmax.f32 %v68, 0.0
    %v181 = vmax.f32 %v69, 0.0
    %v182 = vmax.f32 %v70, 0.0
    %v183 = vmax.f32 %v71, 0.0
    %v184 = vmax.f32 %v72, 0.0
    %v185 = vmax.f32 %v73, 0.0
    %v186 = vmax.f32 %v74, 0.0
    %v187 = vmax.f32 %v75, 0.0
    %v188 = vmax.f32 %v76, 0.0
    %v189 = vmax.f32 %v77, 0.0
    %v190 = vmax.f32 %v78, 0.0
    %v191 = vmax.f32 %v79, 0.0
    %v192 = vmax.f32 %v80, 0.0
    %v193 = vmax.f32 %v81, 0.0
    %v194 = vmax.f32 %v82, 0.0
    %v195 = vmax.f32 %v83, 0.0
    %v196 = vmax.f32 %v84, 0.0
    %v197 = vmax.f32 %v85, 0.0
    %v198 = vmax.f32 %v86, 0.0
    %v199 = vmax.f32 %v87, 0.0
    %v200 = vmax.f32 %v88, 0.0
    %v201 = vmax.f32 %v89, 0.0
    %v202 = vmax.f32 %v90, 0.0
    %v203 = vmax.f32 %v91, 0.0
    %v204 = vmax.f32 %v92, 0.0
    %v205 = vmax.f32 %v93, 0.0
    %v206 = vmax.f32 %v94, 0.0
    %v207 = vmax.f32 %v95, 0.0
    %v208 = vmax.f32 %v96, 0.0
    %v209 = vmax.f32 %v97, 0.0
    %v210 = vmax.f32 %v98, 0.0
    %v211 = vmax.f32 %v99, 0.0
    %v212 = vmax.f32 %v100, 0.0
    %v213 = vmax.f32 %v101, 0.0
    %v214 = vmax.f32 %v102, 0.0
    %v215 = vmax.f32 %v103, 0.0
    %v216 = vmax.f32 %v104, 0.0
    %v217 = vmax.f32 %v105, 0.0
    %v218 = vmax.f32 %v106, 0.0
    %v219 = vmax.f32 %v107, 0.0
    %v220 = vmax.f32 %v108, 0.0
    %v221 = vmax.f32 %v109, 0.0
    %v222 = vmax.f32 %v110, 0.0
    %v223 = vmax.f32 %v111, 0.0
    %v224 = vmax.f32 %v112, 0.0
    %v225 = vmax.f32 %v113, 0.0
    %v226 = vmax.f32 %v114, 0.0
    %v227 = vmax.f32 %v115, 0.0
    %v228 = vmax.f32 %v116, 0.0
    %v229 = vmax.f32 %v117, 0.0
    %v230 = vmax.f32 %v118, 0.0
    %v231 = vmax.f32 %v119, 0.0
    %v232 = vmax.f32 %v120, 0.0
    %v233 = vmax.f32 %v121, 0.0
    %v234 = vmax.f32 %v122, 0.0
    %v235 = vmax.f32 %v123, 0.0
    %v236 = vmax.f32 %v124, 0.0
    %v237 = vmax.f32 %v125, 0.0
    %v238 = vmax.f32 %v126, 0.0
    %v239 = vmax.f32 %v127, 0.0
    %v240 = vmax.f32 %v128, 0.0
    %v241 = vmax.f32 %v129, 0.0
    %v242 = vmax.f32 %v130, 0.0
    %v243 = vmax.f32 %v131, 0.0
    %v244 = vmax.f32 %v132, 0.0
    %v245 = vmax.f32 %v133, 0.0
    %v246 = vmax.f32 %v134, 0.0
    %v247 = vmax.f32 %v135, 0.0
    %v248 = vmax.f32 %v136, 0.0
    %v249 = vmax.f32 %v137, 0.0
    %v250 = vmax.f32 %v138, 0.0
    %v251 = vpack.c.bf16 %v146, %v139
    %v252 = vpack.c.bf16 %v147, %v140
    %v253 = vpack.c.bf16 %v148, %v141
    %v254 = vpack.c.bf16 %v149, %v142
    %v255 = vpack.c.bf16 %v150, %v143
    %v256 = vpack.c.bf16 %v151, %v144
    %v257 = vpack.c.bf16 %v152, %v145
    %v258 = vpack.c.bf16 %v160, %v153
    %v259 = vpack.c.bf16 %v161, %v154
    %v260 = vpack.c.bf16 %v162, %v155
    %v261 = vpack.c.bf16 %v163, %v156
    %v262 = vpack.c.bf16 %v164, %v157
    %v263 = vpack.c.bf16 %v165, %v158
    %v264 = vpack.c.bf16 %v166, %v159
    %v265 = vpack.c.bf16 %v174, %v167
    %v266 = vpack.c.bf16 %v175, %v168
    %v267 = vpack.c.bf16 %v176, %v169
    %v268 = vpack.c.bf16 %v177, %v170
    %v269 = vpack.c.bf16 %v178, %v171
    %v270 = vpack.c.bf16 %v179, %v172
    %v271 = vpack.c.bf16 %v180, %v173
    %v272 = vpack.c.bf16 %v188, %v181
    %v273 = vpack.c.bf16 %v189, %v182
    %v274 = vpack.c.bf16 %v190, %v183
    %v275 = vpack.c.bf16 %v191, %v184
    %v276 = vpack.c.bf16 %v192, %v185
    %v277 = vpack.c.bf16 %v193, %v186
    %v278 = vpack.c.bf16 %v194, %v187
    %v279 = vpack.c.bf16 %v202, %v195
    %v280 = vpack.c.bf16 %v203, %v196
    %v281 = vpack.c.bf16 %v204, %v197
    %v282 = vpack.c.bf16 %v205, %v198
    %v283 = vpack.c.bf16 %v206, %v199
    %v284 = vpack.c.bf16 %v207, %v200
    %v285 = vpack.c.bf16 %v208, %v201
    %v286 = vpack.c.bf16 %v216, %v209
    %v287 = vpack.c.bf16 %v217, %v210
    %v288 = vpack.c.bf16 %v218, %v211
    %v289 = vpack.c.bf16 %v219, %v212
    %v290 = vpack.c.bf16 %v220, %v213
    %v291 = vpack.c.bf16 %v221, %v214
    %v292 = vpack.c.bf16 %v222, %v215
    %v293 = vpack.c.bf16 %v230, %v223
    %v294 = vpack.c.bf16 %v231, %v224
    %v295 = vpack.c.bf16 %v232, %v225
    %v296 = vpack.c.bf16 %v233, %v226
    %v297 = vpack.c.bf16 %v234, %v227
    %v298 = vpack.c.bf16 %v235, %v228
    %v299 = vpack.c.bf16 %v236, %v229
    %v300 = vpack.c.bf16 %v244, %v237
    %v301 = vpack.c.bf16 %v245, %v238
    %v302 = vpack.c.bf16 %v246, %v239
    %v303 = vpack.c.bf16 %v247, %v240
    %v304 = vpack.c.bf16 %v248, %v241
    %v305 = vpack.c.bf16 %v249, %v242
    %v306 = vpack.c.bf16 %v250, %v243
    %v307 = vld [vmem:[#allocation2] sm:$0xf]
    %v308 = vld [vmem:[#allocation2 + $0x4] sm:$0xf]
    %v309 = vld [vmem:[#allocation2 + $0x8] sm:$0xf]
    %v310 = vld [vmem:[#allocation2 + $0xc] sm:$0xf]
    %v311 = vld [vmem:[#allocation2 + $0x10] sm:$0xf]
    %v312 = vld [vmem:[#allocation2 + $0x14] sm:$0xf]
    %v313 = vld [vmem:[#allocation2 + $0x18] sm:$0xf]
    %v314 = vld [vmem:[#allocation2 + $0x1c] sm:$0xf]
    %v315 = vld [vmem:[#allocation2 + $0x20] sm:$0xf]
    %v316 = vld [vmem:[#allocation2 + $0x24] sm:$0xf]
    %v317 = vld [vmem:[#allocation2 + $0x28] sm:$0xf]
    %v318 = vld [vmem:[#allocation2 + $0x2c] sm:$0xf]
    %v319 = vld [vmem:[#allocation2 + $0x30] sm:$0xf]
    %v320 = vld [vmem:[#allocation2 + $0x34] sm:$0xf]
    %v321 = vld [vmem:[#allocation2 + $0x38] sm:$0xf]
    %v322 = vld [vmem:[#allocation2 + $0x3c] sm:$0xf]
    %v323 = vld [vmem:[#allocation2 + $0x40] sm:$0xf]
    %v324 = vld [vmem:[#allocation2 + $0x44] sm:$0xf]
    %v325 = vld [vmem:[#allocation2 + $0x48] sm:$0xf]
    %v326 = vld [vmem:[#allocation2 + $0x4c] sm:$0xf]
    %v327 = vld [vmem:[#allocation2 + $0x50] sm:$0xf]
    %v328 = vld [vmem:[#allocation2 + $0x54] sm:$0xf]
    %v329 = vld [vmem:[#allocation2 + $0x58] sm:$0xf]
    %v330 = vld [vmem:[#allocation2 + $0x5c] sm:$0xf]
    %v331 = vld [vmem:[#allocation2 + $0x60] sm:$0xf]
    %v332 = vld [vmem:[#allocation2 + $0x64] sm:$0xf]
    %v333 = vld [vmem:[#allocation2 + $0x68] sm:$0xf]
    %v334 = vld [vmem:[#allocation2 + $0x6c] sm:$0xf]
    %v335 = vld [vmem:[#allocation2 + $0x70] sm:$0xf]
    %v336 = vld [vmem:[#allocation2 + $0x74] sm:$0xf]
    %v337 = vld [vmem:[#allocation2 + $0x78] sm:$0xf]
    %v338 = vld [vmem:[#allocation2 + $0x7c] sm:$0xf]
    %v339 = vld [vmem:[#allocation2 + $0x80] sm:$0xf]
    %v340 = vld [vmem:[#allocation2 + $0x84] sm:$0xf]
    %v341 = vld [vmem:[#allocation2 + $0x88] sm:$0xf]
    %v342 = vld [vmem:[#allocation2 + $0x8c] sm:$0xf]
    %v343 = vld [vmem:[#allocation2 + $0x90] sm:$0xf]
    %v344 = vld [vmem:[#allocation2 + $0x94] sm:$0xf]
    %v345 = vld [vmem:[#allocation2 + $0x98] sm:$0xf]
    %v346 = vld [vmem:[#allocation2 + $0x9c] sm:$0xf]
    %v347 = vld [vmem:[#allocation2 + $0xa0] sm:$0xf]
    %v348 = vld [vmem:[#allocation2 + $0xa4] sm:$0xf]
    %v349 = vld [vmem:[#allocation2 + $0xa8] sm:$0xf]
    %v350 = vld [vmem:[#allocation2 + $0xac] sm:$0xf]
    %v351 = vld [vmem:[#allocation2 + $0xb0] sm:$0xf]
    %v352 = vld [vmem:[#allocation2 + $0xb4] sm:$0xf]
    %v353 = vld [vmem:[#allocation2 + $0xb8] sm:$0xf]
    %v354 = vld [vmem:[#allocation2 + $0xbc] sm:$0xf]
    %v355 = vld [vmem:[#allocation2 + $0xc0] sm:$0xf]
    %v356 = vld [vmem:[#allocation2 + $0xc4] sm:$0xf]
    %v357 = vld [vmem:[#allocation2 + $0xc8] sm:$0xf]
    %v358 = vld [vmem:[#allocation2 + $0xcc] sm:$0xf]
    %v359 = vld [vmem:[#allocation2 + $0xd0] sm:$0xf]
    %v360 = vld [vmem:[#allocation2 + $0xd4] sm:$0xf]
    %v361 = vld [vmem:[#allocation2 + $0xd8] sm:$0xf]
    %v362 = vld [vmem:[#allocation2 + $0xdc] sm:$0xf]
    %v363 = vld [vmem:[#allocation2 + $0xe0] sm:$0xf]
    %v364 = vld [vmem:[#allocation2 + $0xe4] sm:$0xf]
    %v365 = vld [vmem:[#allocation2 + $0xe8] sm:$0xf]
    %v366 = vld [vmem:[#allocation2 + $0xec] sm:$0xf]
    %v367 = vld [vmem:[#allocation2 + $0xf0] sm:$0xf]
    %v368 = vld [vmem:[#allocation2 + $0xf4] sm:$0xf]
    %v369 = vld [vmem:[#allocation2 + $0xf8] sm:$0xf]
    %v370 = vld [vmem:[#allocation2 + $0xfc] sm:$0xf]
    %v435 = vunpack.c.l.b16 %v307
    %v436 = vunpack.c.l.b16 %v308
    %v437 = vunpack.c.l.b16 %v309
    %v438 = vunpack.c.l.b16 %v310
    %v439 = vunpack.c.l.b16 %v311
    %v440 = vunpack.c.l.b16 %v312
    %v441 = vunpack.c.l.b16 %v313
    %v442 = vunpack.c.l.b16 %v314
    %v443 = vunpack.c.l.b16 %v315
    %v444 = vunpack.c.l.b16 %v316
    %v445 = vunpack.c.l.b16 %v317
    %v446 = vunpack.c.l.b16 %v318
    %v447 = vunpack.c.l.b16 %v319
    %v448 = vunpack.c.l.b16 %v320
    %v449 = vunpack.c.l.b16 %v321
    %v450 = vunpack.c.l.b16 %v322
    %v451 = vunpack.c.l.b16 %v323
    %v452 = vunpack.c.l.b16 %v324
    %v453 = vunpack.c.l.b16 %v325
    %v454 = vunpack.c.l.b16 %v326
    %v455 = vunpack.c.l.b16 %v327
    %v456 = vunpack.c.l.b16 %v328
    %v457 = vunpack.c.l.b16 %v329
    %v458 = vunpack.c.l.b16 %v330
    %v459 = vunpack.c.l.b16 %v331
    %v460 = vunpack.c.l.b16 %v332
    %v461 = vunpack.c.l.b16 %v333
    %v462 = vunpack.c.l.b16 %v334
    %v463 = vunpack.c.l.b16 %v335
    %v464 = vunpack.c.l.b16 %v336
    %v465 = vunpack.c.l.b16 %v337
    %v466 = vunpack.c.l.b16 %v338
    %v467 = vunpack.c.l.b16 %v339
    %v468 = vunpack.c.l.b16 %v340
    %v469 = vunpack.c.l.b16 %v341
    %v470 = vunpack.c.l.b16 %v342
    %v471 = vunpack.c.l.b16 %v343
    %v472 = vunpack.c.l.b16 %v344
    %v473 = vunpack.c.l.b16 %v345
    %v474 = vunpack.c.l.b16 %v346
    %v475 = vunpack.c.l.b16 %v347
    %v476 = vunpack.c.l.b16 %v348
    %v477 = vunpack.c.l.b16 %v349
    %v478 = vunpack.c.l.b16 %v350
    %v479 = vunpack.c.l.b16 %v351
    %v480 = vunpack.c.l.b16 %v352
    %v481 = vunpack.c.l.b16 %v353
    %v482 = vunpack.c.l.b16 %v354
    %v483 = vunpack.c.l.b16 %v355
    %v484 = vunpack.c.l.b16 %v356
    %v485 = vunpack.c.l.b16 %v357
    %v486 = vunpack.c.l.b16 %v358
    %v487 = vunpack.c.l.b16 %v359
    %v488 = vunpack.c.l.b16 %v360
    %v489 = vunpack.c.l.b16 %v361
    %v490 = vunpack.c.l.b16 %v362
    %v491 = vunpack.c.l.b16 %v363
    %v492 = vunpack.c.l.b16 %v364
    %v493 = vunpack.c.l.b16 %v365
    %v494 = vunpack.c.l.b16 %v366
    %v495 = vunpack.c.l.b16 %v367
    %v496 = vunpack.c.l.b16 %v368
    %v497 = vunpack.c.l.b16 %v369
    %v498 = vunpack.c.l.b16 %v370
    %v499 = vpack.c.b16 %v436, %v435
    %v500 = vpack.c.b16 %v438, %v437
    %v501 = vpack.c.b16 %v440, %v439
    %v502 = vpack.c.b16 %v442, %v441
    %v503 = vpack.c.b16 %v444, %v443
    %v504 = vpack.c.b16 %v446, %v445
    %v505 = vpack.c.b16 %v448, %v447
    %v506 = vpack.c.b16 %v450, %v449
    %v507 = vpack.c.b16 %v452, %v451
    %v508 = vpack.c.b16 %v454, %v453
    %v509 = vpack.c.b16 %v456, %v455
    %v510 = vpack.c.b16 %v458, %v457
    %v511 = vpack.c.b16 %v460, %v459
    %v512 = vpack.c.b16 %v462, %v461
    %v513 = vpack.c.b16 %v464, %v463
    %v514 = vpack.c.b16 %v466, %v465
    %v515 = vpack.c.b16 %v468, %v467
    %v516 = vpack.c.b16 %v470, %v469
    %v517 = vpack.c.b16 %v472, %v471
    %v518 = vpack.c.b16 %v474, %v473
    %v519 = vpack.c.b16 %v476, %v475
    %v520 = vpack.c.b16 %v478, %v477
    %v521 = vpack.c.b16 %v480, %v479
    %v522 = vpack.c.b16 %v482, %v481
    %v523 = vpack.c.b16 %v484, %v483
    %v524 = vpack.c.b16 %v486, %v485
    %v525 = vpack.c.b16 %v488, %v487
    %v526 = vpack.c.b16 %v490, %v489
    %v527 = vpack.c.b16 %v492, %v491
    %v528 = vpack.c.b16 %v494, %v493
    %v529 = vpack.c.b16 %v496, %v495
    %v530 = vpack.c.b16 %v498, %v497
    %563 = vmatpush.bf16.msra.mxu0 %v300
    %564 = vmatpush.bf16.msra.mxu0 %v293
    %565 = vmatpush.bf16.msra.mxu0 %v286
    %566 = vmatpush.bf16.msra.mxu0 %v279
    %567 = vmatpush.bf16.msra.mxu0 %v272
    %568 = vmatpush.bf16.msra.mxu0 %v265
    %569 = vmatpush.bf16.msra.mxu0 %v258
    %570 = vmatpush.bf16.msra.mxu0 %v251
    %571 = vmatmul.bf16.gmra.mxu0 %v499
    %v572 = vpop.f32.mrf.mxu0
    %v573 = vadd.f32 0.0, %v572
    %v574 = vpop.f32.mrf.mxu0
    %v575 = vadd.f32 0.0, %v574
    %576 = vmatmul.bf16.gmra.mxu0 %v500
    %v577 = vpop.f32.mrf.mxu0
    %v578 = vadd.f32 0.0, %v577
    %v579 = vpop.f32.mrf.mxu0
    %v580 = vadd.f32 0.0, %v579
    %581 = vmatmul.bf16.gmra.mxu0 %v501
    %v582 = vpop.f32.mrf.mxu0
    %v583 = vadd.f32 0.0, %v582
    %v584 = vpop.f32.mrf.mxu0
    %v585 = vadd.f32 0.0, %v584
    %586 = vmatmul.bf16.gmra.mxu0 %v502
    %v587 = vpop.f32.mrf.mxu0
    %v588 = vadd.f32 0.0, %v587
    %v589 = vpop.f32.mrf.mxu0
    %v590 = vadd.f32 0.0, %v589
    %591 = vmatmul.bf16.gmra.mxu0 %v503
    %v592 = vpop.f32.mrf.mxu0
    %v593 = vadd.f32 0.0, %v592
    %v594 = vpop.f32.mrf.mxu0
    %v595 = vadd.f32 0.0, %v594
    %596 = vmatmul.bf16.gmra.mxu0 %v504
    %v597 = vpop.f32.mrf.mxu0
    %v598 = vadd.f32 0.0, %v597
    %v599 = vpop.f32.mrf.mxu0
    %v600 = vadd.f32 0.0, %v599
    %601 = vmatmul.bf16.gmra.mxu0 %v505
    %v602 = vpop.f32.mrf.mxu0
    %v603 = vadd.f32 0.0, %v602
    %v604 = vpop.f32.mrf.mxu0
    %v605 = vadd.f32 0.0, %v604
    %606 = vmatmul.bf16.gmra.mxu0 %v506
    %v607 = vpop.f32.mrf.mxu0
    %v608 = vadd.f32 0.0, %v607
    %v609 = vpop.f32.mrf.mxu0
    %v610 = vadd.f32 0.0, %v609
    %611 = vmatmul.bf16.gmra.mxu0 %v507
    %v612 = vpop.f32.mrf.mxu0
    %v613 = vadd.f32 0.0, %v612
    %v614 = vpop.f32.mrf.mxu0
    %v615 = vadd.f32 0.0, %v614
    %616 = vmatmul.bf16.gmra.mxu0 %v508
    %v617 = vpop.f32.mrf.mxu0
    %v618 = vadd.f32 0.0, %v617
    %v619 = vpop.f32.mrf.mxu0
    %v620 = vadd.f32 0.0, %v619
    %621 = vmatmul.bf16.gmra.mxu0 %v509
    %v622 = vpop.f32.mrf.mxu0
    %v623 = vadd.f32 0.0, %v622
    %v624 = vpop.f32.mrf.mxu0
    %v625 = vadd.f32 0.0, %v624
    %626 = vmatmul.bf16.gmra.mxu0 %v510
    %v627 = vpop.f32.mrf.mxu0
    %v628 = vadd.f32 0.0, %v627
    %v629 = vpop.f32.mrf.mxu0
    %v630 = vadd.f32 0.0, %v629
    %631 = vmatmul.bf16.gmra.mxu0 %v511
    %v632 = vpop.f32.mrf.mxu0
    %v633 = vadd.f32 0.0, %v632
    %v634 = vpop.f32.mrf.mxu0
    %v635 = vadd.f32 0.0, %v634
    %636 = vmatmul.bf16.gmra.mxu0 %v512
    %v637 = vpop.f32.mrf.mxu0
    %v638 = vadd.f32 0.0, %v637
    %v639 = vpop.f32.mrf.mxu0
    %v640 = vadd.f32 0.0, %v639
    %641 = vmatmul.bf16.gmra.mxu0 %v513
    %v642 = vpop.f32.mrf.mxu0
    %v643 = vadd.f32 0.0, %v642
    %v644 = vpop.f32.mrf.mxu0
    %v645 = vadd.f32 0.0, %v644
    %646 = vmatmul.bf16.gmra.mxu0 %v514
    %v647 = vpop.f32.mrf.mxu0
    %v648 = vadd.f32 0.0, %v647
    %v649 = vpop.f32.mrf.mxu0
    %v650 = vadd.f32 0.0, %v649
    %651 = vmatmul.bf16.gmra.mxu0 %v515
    %v652 = vpop.f32.mrf.mxu0
    %v653 = vadd.f32 0.0, %v652
    %v654 = vpop.f32.mrf.mxu0
    %v655 = vadd.f32 0.0, %v654
    %656 = vmatmul.bf16.gmra.mxu0 %v516
    %v657 = vpop.f32.mrf.mxu0
    %v658 = vadd.f32 0.0, %v657
    %v659 = vpop.f32.mrf.mxu0
    %v660 = vadd.f32 0.0, %v659
    %661 = vmatmul.bf16.gmra.mxu0 %v517
    %v662 = vpop.f32.mrf.mxu0
    %v663 = vadd.f32 0.0, %v662
    %v664 = vpop.f32.mrf.mxu0
    %v665 = vadd.f32 0.0, %v664
    %666 = vmatmul.bf16.gmra.mxu0 %v518
    %v667 = vpop.f32.mrf.mxu0
    %v668 = vadd.f32 0.0, %v667
    %v669 = vpop.f32.mrf.mxu0
    %v670 = vadd.f32 0.0, %v669
    %671 = vmatmul.bf16.gmra.mxu0 %v519
    %v672 = vpop.f32.mrf.mxu0
    %v673 = vadd.f32 0.0, %v672
    %v674 = vpop.f32.mrf.mxu0
    %v675 = vadd.f32 0.0, %v674
    %676 = vmatmul.bf16.gmra.mxu0 %v520
    %v677 = vpop.f32.mrf.mxu0
    %v678 = vadd.f32 0.0, %v677
    %v679 = vpop.f32.mrf.mxu0
    %v680 = vadd.f32 0.0, %v679
    %681 = vmatmul.bf16.gmra.mxu0 %v521
    %v682 = vpop.f32.mrf.mxu0
    %v683 = vadd.f32 0.0, %v682
    %v684 = vpop.f32.mrf.mxu0
    %v685 = vadd.f32 0.0, %v684
    %686 = vmatmul.bf16.gmra.mxu0 %v522
    %v687 = vpop.f32.mrf.mxu0
    %v688 = vadd.f32 0.0, %v687
    %v689 = vpop.f32.mrf.mxu0
    %v690 = vadd.f32 0.0, %v689
    %691 = vmatmul.bf16.gmra.mxu0 %v523
    %v692 = vpop.f32.mrf.mxu0
    %v693 = vadd.f32 0.0, %v692
    %v694 = vpop.f32.mrf.mxu0
    %v695 = vadd.f32 0.0, %v694
    %696 = vmatmul.bf16.gmra.mxu0 %v524
    %v697 = vpop.f32.mrf.mxu0
    %v698 = vadd.f32 0.0, %v697
    %v699 = vpop.f32.mrf.mxu0
    %v700 = vadd.f32 0.0, %v699
    %701 = vmatmul.bf16.gmra.mxu0 %v525
    %v702 = vpop.f32.mrf.mxu0
    %v703 = vadd.f32 0.0, %v702
    %v704 = vpop.f32.mrf.mxu0
    %v705 = vadd.f32 0.0, %v704
    %706 = vmatmul.bf16.gmra.mxu0 %v526
    %v707 = vpop.f32.mrf.mxu0
    %v708 = vadd.f32 0.0, %v707
    %v709 = vpop.f32.mrf.mxu0
    %v710 = vadd.f32 0.0, %v709
    %711 = vmatmul.bf16.gmra.mxu0 %v527
    %v712 = vpop.f32.mrf.mxu0
    %v713 = vadd.f32 0.0, %v712
    %v714 = vpop.f32.mrf.mxu0
    %v715 = vadd.f32 0.0, %v714
    %716 = vmatmul.bf16.gmra.mxu0 %v528
    %v717 = vpop.f32.mrf.mxu0
    %v718 = vadd.f32 0.0, %v717
    %v719 = vpop.f32.mrf.mxu0
    %v720 = vadd.f32 0.0, %v719
    %721 = vmatmul.bf16.gmra.mxu0 %v529
    %v722 = vpop.f32.mrf.mxu0
    %v723 = vadd.f32 0.0, %v722
    %v724 = vpop.f32.mrf.mxu0
    %v725 = vadd.f32 0.0, %v724
    %726 = vmatmul.bf16.gmra.mxu0 %v530
    %v727 = vpop.f32.mrf.mxu0
    %v728 = vadd.f32 0.0, %v727
    %v729 = vpop.f32.mrf.mxu0
    %v730 = vadd.f32 0.0, %v729
    %731 = vdwg.mxu0
    %732 = vmatpush.bf16.msra.mxu0 %v301
    %733 = vmatpush.bf16.msra.mxu0 %v294
    %734 = vmatpush.bf16.msra.mxu0 %v287
    %735 = vmatpush.bf16.msra.mxu0 %v280
    %736 = vmatpush.bf16.msra.mxu0 %v273
    %737 = vmatpush.bf16.msra.mxu0 %v266
    %738 = vmatpush.bf16.msra.mxu0 %v259
    %739 = vmatpush.bf16.msra.mxu0 %v252
    %740 = vmatmul.bf16.gmra.mxu0 %v499
    %v741 = vpop.f32.mrf.mxu0
    %v742 = vadd.f32 0.0, %v741
    %v743 = vpop.f32.mrf.mxu0
    %v744 = vadd.f32 0.0, %v743
    %745 = vmatmul.bf16.gmra.mxu0 %v500
    %v746 = vpop.f32.mrf.mxu0
    %v747 = vadd.f32 0.0, %v746
    %v748 = vpop.f32.mrf.mxu0
    %v749 = vadd.f32 0.0, %v748
    %750 = vmatmul.bf16.gmra.mxu0 %v501
    %v751 = vpop.f32.mrf.mxu0
    %v752 = vadd.f32 0.0, %v751
    %v753 = vpop.f32.mrf.mxu0
    %v754 = vadd.f32 0.0, %v753
    %755 = vmatmul.bf16.gmra.mxu0 %v502
    %v756 = vpop.f32.mrf.mxu0
    %v757 = vadd.f32 0.0, %v756
    %v758 = vpop.f32.mrf.mxu0
    %v759 = vadd.f32 0.0, %v758
    %760 = vmatmul.bf16.gmra.mxu0 %v503
    %v761 = vpop.f32.mrf.mxu0
    %v762 = vadd.f32 0.0, %v761
    %v763 = vpop.f32.mrf.mxu0
    %v764 = vadd.f32 0.0, %v763
    %765 = vmatmul.bf16.gmra.mxu0 %v504
    %v766 = vpop.f32.mrf.mxu0
    %v767 = vadd.f32 0.0, %v766
    %v768 = vpop.f32.mrf.mxu0
    %v769 = vadd.f32 0.0, %v768
    %770 = vmatmul.bf16.gmra.mxu0 %v505
    %v771 = vpop.f32.mrf.mxu0
    %v772 = vadd.f32 0.0, %v771
    %v773 = vpop.f32.mrf.mxu0
    %v774 = vadd.f32 0.0, %v773
    %775 = vmatmul.bf16.gmra.mxu0 %v506
    %v776 = vpop.f32.mrf.mxu0
    %v777 = vadd.f32 0.0, %v776
    %v778 = vpop.f32.mrf.mxu0
    %v779 = vadd.f32 0.0, %v778
    %780 = vmatmul.bf16.gmra.mxu0 %v507
    %v781 = vpop.f32.mrf.mxu0
    %v782 = vadd.f32 0.0, %v781
    %v783 = vpop.f32.mrf.mxu0
    %v784 = vadd.f32 0.0, %v783
    %785 = vmatmul.bf16.gmra.mxu0 %v508
    %v786 = vpop.f32.mrf.mxu0
    %v787 = vadd.f32 0.0, %v786
    %v788 = vpop.f32.mrf.mxu0
    %v789 = vadd.f32 0.0, %v788
    %790 = vmatmul.bf16.gmra.mxu0 %v509
    %v791 = vpop.f32.mrf.mxu0
    %v792 = vadd.f32 0.0, %v791
    %v793 = vpop.f32.mrf.mxu0
    %v794 = vadd.f32 0.0, %v793
    %795 = vmatmul.bf16.gmra.mxu0 %v510
    %v796 = vpop.f32.mrf.mxu0
    %v797 = vadd.f32 0.0, %v796
    %v798 = vpop.f32.mrf.mxu0
    %v799 = vadd.f32 0.0, %v798
    %800 = vmatmul.bf16.gmra.mxu0 %v511
    %v801 = vpop.f32.mrf.mxu0
    %v802 = vadd.f32 0.0, %v801
    %v803 = vpop.f32.mrf.mxu0
    %v804 = vadd.f32 0.0, %v803
    %805 = vmatmul.bf16.gmra.mxu0 %v512
    %v806 = vpop.f32.mrf.mxu0
    %v807 = vadd.f32 0.0, %v806
    %v808 = vpop.f32.mrf.mxu0
    %v809 = vadd.f32 0.0, %v808
    %810 = vmatmul.bf16.gmra.mxu0 %v513
    %v811 = vpop.f32.mrf.mxu0
    %v812 = vadd.f32 0.0, %v811
    %v813 = vpop.f32.mrf.mxu0
    %v814 = vadd.f32 0.0, %v813
    %815 = vmatmul.bf16.gmra.mxu0 %v514
    %v816 = vpop.f32.mrf.mxu0
    %v817 = vadd.f32 0.0, %v816
    %v818 = vpop.f32.mrf.mxu0
    %v819 = vadd.f32 0.0, %v818
    %820 = vmatmul.bf16.gmra.mxu0 %v515
    %v821 = vpop.f32.mrf.mxu0
    %v822 = vadd.f32 0.0, %v821
    %v823 = vpop.f32.mrf.mxu0
    %v824 = vadd.f32 0.0, %v823
    %825 = vmatmul.bf16.gmra.mxu0 %v516
    %v826 = vpop.f32.mrf.mxu0
    %v827 = vadd.f32 0.0, %v826
    %v828 = vpop.f32.mrf.mxu0
    %v829 = vadd.f32 0.0, %v828
    %830 = vmatmul.bf16.gmra.mxu0 %v517
    %v831 = vpop.f32.mrf.mxu0
    %v832 = vadd.f32 0.0, %v831
    %v833 = vpop.f32.mrf.mxu0
    %v834 = vadd.f32 0.0, %v833
    %835 = vmatmul.bf16.gmra.mxu0 %v518
    %v836 = vpop.f32.mrf.mxu0
    %v837 = vadd.f32 0.0, %v836
    %v838 = vpop.f32.mrf.mxu0
    %v839 = vadd.f32 0.0, %v838
    %840 = vmatmul.bf16.gmra.mxu0 %v519
    %v841 = vpop.f32.mrf.mxu0
    %v842 = vadd.f32 0.0, %v841
    %v843 = vpop.f32.mrf.mxu0
    %v844 = vadd.f32 0.0, %v843
    %845 = vmatmul.bf16.gmra.mxu0 %v520
    %v846 = vpop.f32.mrf.mxu0
    %v847 = vadd.f32 0.0, %v846
    %v848 = vpop.f32.mrf.mxu0
    %v849 = vadd.f32 0.0, %v848
    %850 = vmatmul.bf16.gmra.mxu0 %v521
    %v851 = vpop.f32.mrf.mxu0
    %v852 = vadd.f32 0.0, %v851
    %v853 = vpop.f32.mrf.mxu0
    %v854 = vadd.f32 0.0, %v853
    %855 = vmatmul.bf16.gmra.mxu0 %v522
    %v856 = vpop.f32.mrf.mxu0
    %v857 = vadd.f32 0.0, %v856
    %v858 = vpop.f32.mrf.mxu0
    %v859 = vadd.f32 0.0, %v858
    %860 = vmatmul.bf16.gmra.mxu0 %v523
    %v861 = vpop.f32.mrf.mxu0
    %v862 = vadd.f32 0.0, %v861
    %v863 = vpop.f32.mrf.mxu0
    %v864 = vadd.f32 0.0, %v863
    %865 = vmatmul.bf16.gmra.mxu0 %v524
    %v866 = vpop.f32.mrf.mxu0
    %v867 = vadd.f32 0.0, %v866
    %v868 = vpop.f32.mrf.mxu0
    %v869 = vadd.f32 0.0, %v868
    %870 = vmatmul.bf16.gmra.mxu0 %v525
    %v871 = vpop.f32.mrf.mxu0
    %v872 = vadd.f32 0.0, %v871
    %v873 = vpop.f32.mrf.mxu0
    %v874 = vadd.f32 0.0, %v873
    %875 = vmatmul.bf16.gmra.mxu0 %v526
    %v876 = vpop.f32.mrf.mxu0
    %v877 = vadd.f32 0.0, %v876
    %v878 = vpop.f32.mrf.mxu0
    %v879 = vadd.f32 0.0, %v878
    %880 = vmatmul.bf16.gmra.mxu0 %v527
    %v881 = vpop.f32.mrf.mxu0
    %v882 = vadd.f32 0.0, %v881
    %v883 = vpop.f32.mrf.mxu0
    %v884 = vadd.f32 0.0, %v883
    %885 = vmatmul.bf16.gmra.mxu0 %v528
    %v886 = vpop.f32.mrf.mxu0
    %v887 = vadd.f32 0.0, %v886
    %v888 = vpop.f32.mrf.mxu0
    %v889 = vadd.f32 0.0, %v888
    %890 = vmatmul.bf16.gmra.mxu0 %v529
    %v891 = vpop.f32.mrf.mxu0
    %v892 = vadd.f32 0.0, %v891
    %v893 = vpop.f32.mrf.mxu0
    %v894 = vadd.f32 0.0, %v893
    %895 = vmatmul.bf16.gmra.mxu0 %v530
    %v896 = vpop.f32.mrf.mxu0
    %v897 = vadd.f32 0.0, %v896
    %v898 = vpop.f32.mrf.mxu0
    %v899 = vadd.f32 0.0, %v898
    %900 = vdwg.mxu0
    %901 = vmatpush.bf16.msra.mxu0 %v302
    %902 = vmatpush.bf16.msra.mxu0 %v295
    %903 = vmatpush.bf16.msra.mxu0 %v288
    %904 = vmatpush.bf16.msra.mxu0 %v281
    %905 = vmatpush.bf16.msra.mxu0 %v274
    %906 = vmatpush.bf16.msra.mxu0 %v267
    %907 = vmatpush.bf16.msra.mxu0 %v260
    %908 = vmatpush.bf16.msra.mxu0 %v253
    %909 = vmatmul.bf16.gmra.mxu0 %v499
    %v910 = vpop.f32.mrf.mxu0
    %v911 = vadd.f32 0.0, %v910
    %v912 = vpop.f32.mrf.mxu0
    %v913 = vadd.f32 0.0, %v912
    %914 = vmatmul.bf16.gmra.mxu0 %v500
    %v915 = vpop.f32.mrf.mxu0
    %v916 = vadd.f32 0.0, %v915
    %v917 = vpop.f32.mrf.mxu0
    %v918 = vadd.f32 0.0, %v917
    %919 = vmatmul.bf16.gmra.mxu0 %v501
    %v920 = vpop.f32.mrf.mxu0
    %v921 = vadd.f32 0.0, %v920
    %v922 = vpop.f32.mrf.mxu0
    %v923 = vadd.f32 0.0, %v922
    %924 = vmatmul.bf16.gmra.mxu0 %v502
    %v925 = vpop.f32.mrf.mxu0
    %v926 = vadd.f32 0.0, %v925
    %v927 = vpop.f32.mrf.mxu0
    %v928 = vadd.f32 0.0, %v927
    %929 = vmatmul.bf16.gmra.mxu0 %v503
    %v930 = vpop.f32.mrf.mxu0
    %v931 = vadd.f32 0.0, %v930
    %v932 = vpop.f32.mrf.mxu0
    %v933 = vadd.f32 0.0, %v932
    %934 = vmatmul.bf16.gmra.mxu0 %v504
    %v935 = vpop.f32.mrf.mxu0
    %v936 = vadd.f32 0.0, %v935
    %v937 = vpop.f32.mrf.mxu0
    %v938 = vadd.f32 0.0, %v937
    %939 = vmatmul.bf16.gmra.mxu0 %v505
    %v940 = vpop.f32.mrf.mxu0
    %v941 = vadd.f32 0.0, %v940
    %v942 = vpop.f32.mrf.mxu0
    %v943 = vadd.f32 0.0, %v942
    %944 = vmatmul.bf16.gmra.mxu0 %v506
    %v945 = vpop.f32.mrf.mxu0
    %v946 = vadd.f32 0.0, %v945
    %v947 = vpop.f32.mrf.mxu0
    %v948 = vadd.f32 0.0, %v947
    %949 = vmatmul.bf16.gmra.mxu0 %v507
    %v950 = vpop.f32.mrf.mxu0
    %v951 = vadd.f32 0.0, %v950
    %v952 = vpop.f32.mrf.mxu0
    %v953 = vadd.f32 0.0, %v952
    %954 = vmatmul.bf16.gmra.mxu0 %v508
    %v955 = vpop.f32.mrf.mxu0
    %v956 = vadd.f32 0.0, %v955
    %v957 = vpop.f32.mrf.mxu0
    %v958 = vadd.f32 0.0, %v957
    %959 = vmatmul.bf16.gmra.mxu0 %v509
    %v960 = vpop.f32.mrf.mxu0
    %v961 = vadd.f32 0.0, %v960
    %v962 = vpop.f32.mrf.mxu0
    %v963 = vadd.f32 0.0, %v962
    %964 = vmatmul.bf16.gmra.mxu0 %v510
    %v965 = vpop.f32.mrf.mxu0
    %v966 = vadd.f32 0.0, %v965
    %v967 = vpop.f32.mrf.mxu0
    %v968 = vadd.f32 0.0, %v967
    %969 = vmatmul.bf16.gmra.mxu0 %v511
    %v970 = vpop.f32.mrf.mxu0
    %v971 = vadd.f32 0.0, %v970
    %v972 = vpop.f32.mrf.mxu0
    %v973 = vadd.f32 0.0, %v972
    %974 = vmatmul.bf16.gmra.mxu0 %v512
    %v975 = vpop.f32.mrf.mxu0
    %v976 = vadd.f32 0.0, %v975
    %v977 = vpop.f32.mrf.mxu0
    %v978 = vadd.f32 0.0, %v977
    %979 = vmatmul.bf16.gmra.mxu0 %v513
    %v980 = vpop.f32.mrf.mxu0
    %v981 = vadd.f32 0.0, %v980
    %v982 = vpop.f32.mrf.mxu0
    %v983 = vadd.f32 0.0, %v982
    %984 = vmatmul.bf16.gmra.mxu0 %v514
    %v985 = vpop.f32.mrf.mxu0
    %v986 = vadd.f32 0.0, %v985
    %v987 = vpop.f32.mrf.mxu0
    %v988 = vadd.f32 0.0, %v987
    %989 = vmatmul.bf16.gmra.mxu0 %v515
    %v990 = vpop.f32.mrf.mxu0
    %v991 = vadd.f32 0.0, %v990
    %v992 = vpop.f32.mrf.mxu0
    %v993 = vadd.f32 0.0, %v992
    %994 = vmatmul.bf16.gmra.mxu0 %v516
    %v995 = vpop.f32.mrf.mxu0
    %v996 = vadd.f32 0.0, %v995
    %v997 = vpop.f32.mrf.mxu0
    %v998 = vadd.f32 0.0, %v997
    %999 = vmatmul.bf16.gmra.mxu0 %v517
    %v1000 = vpop.f32.mrf.mxu0
    %v1001 = vadd.f32 0.0, %v1000
    %v1002 = vpop.f32.mrf.mxu0
    %v1003 = vadd.f32 0.0, %v1002
    %1004 = vmatmul.bf16.gmra.mxu0 %v518
    %v1005 = vpop.f32.mrf.mxu0
    %v1006 = vadd.f32 0.0, %v1005
    %v1007 = vpop.f32.mrf.mxu0
    %v1008 = vadd.f32 0.0, %v1007
    %1009 = vmatmul.bf16.gmra.mxu0 %v519
    %v1010 = vpop.f32.mrf.mxu0
    %v1011 = vadd.f32 0.0, %v1010
    %v1012 = vpop.f32.mrf.mxu0
    %v1013 = vadd.f32 0.0, %v1012
    %1014 = vmatmul.bf16.gmra.mxu0 %v520
    %v1015 = vpop.f32.mrf.mxu0
    %v1016 = vadd.f32 0.0, %v1015
    %v1017 = vpop.f32.mrf.mxu0
    %v1018 = vadd.f32 0.0, %v1017
    %1019 = vmatmul.bf16.gmra.mxu0 %v521
    %v1020 = vpop.f32.mrf.mxu0
    %v1021 = vadd.f32 0.0, %v1020
    %v1022 = vpop.f32.mrf.mxu0
    %v1023 = vadd.f32 0.0, %v1022
    %1024 = vmatmul.bf16.gmra.mxu0 %v522
    %v1025 = vpop.f32.mrf.mxu0
    %v1026 = vadd.f32 0.0, %v1025
    %v1027 = vpop.f32.mrf.mxu0
    %v1028 = vadd.f32 0.0, %v1027
    %1029 = vmatmul.bf16.gmra.mxu0 %v523
    %v1030 = vpop.f32.mrf.mxu0
    %v1031 = vadd.f32 0.0, %v1030
    %v1032 = vpop.f32.mrf.mxu0
    %v1033 = vadd.f32 0.0, %v1032
    %1034 = vmatmul.bf16.gmra.mxu0 %v524
    %v1035 = vpop.f32.mrf.mxu0
    %v1036 = vadd.f32 0.0, %v1035
    %v1037 = vpop.f32.mrf.mxu0
    %v1038 = vadd.f32 0.0, %v1037
    %1039 = vmatmul.bf16.gmra.mxu0 %v525
    %v1040 = vpop.f32.mrf.mxu0
    %v1041 = vadd.f32 0.0, %v1040
    %v1042 = vpop.f32.mrf.mxu0
    %v1043 = vadd.f32 0.0, %v1042
    %1044 = vmatmul.bf16.gmra.mxu0 %v526
    %v1045 = vpop.f32.mrf.mxu0
    %v1046 = vadd.f32 0.0, %v1045
    %v1047 = vpop.f32.mrf.mxu0
    %v1048 = vadd.f32 0.0, %v1047
    %1049 = vmatmul.bf16.gmra.mxu0 %v527
    %v1050 = vpop.f32.mrf.mxu0
    %v1051 = vadd.f32 0.0, %v1050
    %v1052 = vpop.f32.mrf.mxu0
    %v1053 = vadd.f32 0.0, %v1052
    %1054 = vmatmul.bf16.gmra.mxu0 %v528
    %v1055 = vpop.f32.mrf.mxu0
    %v1056 = vadd.f32 0.0, %v1055
    %v1057 = vpop.f32.mrf.mxu0
    %v1058 = vadd.f32 0.0, %v1057
    %1059 = vmatmul.bf16.gmra.mxu0 %v529
    %v1060 = vpop.f32.mrf.mxu0
    %v1061 = vadd.f32 0.0, %v1060
    %v1062 = vpop.f32.mrf.mxu0
    %v1063 = vadd.f32 0.0, %v1062
    %1064 = vmatmul.bf16.gmra.mxu0 %v530
    %v1065 = vpop.f32.mrf.mxu0
    %v1066 = vadd.f32 0.0, %v1065
    %v1067 = vpop.f32.mrf.mxu0
    %v1068 = vadd.f32 0.0, %v1067
    %1069 = vdwg.mxu0
    %1070 = vmatpush.bf16.msra.mxu0 %v303
    %1071 = vmatpush.bf16.msra.mxu0 %v296
    %1072 = vmatpush.bf16.msra.mxu0 %v289
    %1073 = vmatpush.bf16.msra.mxu0 %v282
    %1074 = vmatpush.bf16.msra.mxu0 %v275
    %1075 = vmatpush.bf16.msra.mxu0 %v268
    %1076 = vmatpush.bf16.msra.mxu0 %v261
    %1077 = vmatpush.bf16.msra.mxu0 %v254
    %1078 = vmatmul.bf16.gmra.mxu0 %v499
    %v1079 = vpop.f32.mrf.mxu0
    %v1080 = vadd.f32 0.0, %v1079
    %v1081 = vpop.f32.mrf.mxu0
    %v1082 = vadd.f32 0.0, %v1081
    %1083 = vmatmul.bf16.gmra.mxu0 %v500
    %v1084 = vpop.f32.mrf.mxu0
    %v1085 = vadd.f32 0.0, %v1084
    %v1086 = vpop.f32.mrf.mxu0
    %v1087 = vadd.f32 0.0, %v1086
    %1088 = vmatmul.bf16.gmra.mxu0 %v501
    %v1089 = vpop.f32.mrf.mxu0
    %v1090 = vadd.f32 0.0, %v1089
    %v1091 = vpop.f32.mrf.mxu0
    %v1092 = vadd.f32 0.0, %v1091
    %1093 = vmatmul.bf16.gmra.mxu0 %v502
    %v1094 = vpop.f32.mrf.mxu0
    %v1095 = vadd.f32 0.0, %v1094
    %v1096 = vpop.f32.mrf.mxu0
    %v1097 = vadd.f32 0.0, %v1096
    %1098 = vmatmul.bf16.gmra.mxu0 %v503
    %v1099 = vpop.f32.mrf.mxu0
    %v1100 = vadd.f32 0.0, %v1099
    %v1101 = vpop.f32.mrf.mxu0
    %v1102 = vadd.f32 0.0, %v1101
    %1103 = vmatmul.bf16.gmra.mxu0 %v504
    %v1104 = vpop.f32.mrf.mxu0
    %v1105 = vadd.f32 0.0, %v1104
    %v1106 = vpop.f32.mrf.mxu0
    %v1107 = vadd.f32 0.0, %v1106
    %1108 = vmatmul.bf16.gmra.mxu0 %v505
    %v1109 = vpop.f32.mrf.mxu0
    %v1110 = vadd.f32 0.0, %v1109
    %v1111 = vpop.f32.mrf.mxu0
    %v1112 = vadd.f32 0.0, %v1111
    %1113 = vmatmul.bf16.gmra.mxu0 %v506
    %v1114 = vpop.f32.mrf.mxu0
    %v1115 = vadd.f32 0.0, %v1114
    %v1116 = vpop.f32.mrf.mxu0
    %v1117 = vadd.f32 0.0, %v1116
    %1118 = vmatmul.bf16.gmra.mxu0 %v507
    %v1119 = vpop.f32.mrf.mxu0
    %v1120 = vadd.f32 0.0, %v1119
    %v1121 = vpop.f32.mrf.mxu0
    %v1122 = vadd.f32 0.0, %v1121
    %1123 = vmatmul.bf16.gmra.mxu0 %v508
    %v1124 = vpop.f32.mrf.mxu0
    %v1125 = vadd.f32 0.0, %v1124
    %v1126 = vpop.f32.mrf.mxu0
    %v1127 = vadd.f32 0.0, %v1126
    %1128 = vmatmul.bf16.gmra.mxu0 %v509
    %v1129 = vpop.f32.mrf.mxu0
    %v1130 = vadd.f32 0.0, %v1129
    %v1131 = vpop.f32.mrf.mxu0
    %v1132 = vadd.f32 0.0, %v1131
    %1133 = vmatmul.bf16.gmra.mxu0 %v510
    %v1134 = vpop.f32.mrf.mxu0
    %v1135 = vadd.f32 0.0, %v1134
    %v1136 = vpop.f32.mrf.mxu0
    %v1137 = vadd.f32 0.0, %v1136
    %1138 = vmatmul.bf16.gmra.mxu0 %v511
    %v1139 = vpop.f32.mrf.mxu0
    %v1140 = vadd.f32 0.0, %v1139
    %v1141 = vpop.f32.mrf.mxu0
    %v1142 = vadd.f32 0.0, %v1141
    %1143 = vmatmul.bf16.gmra.mxu0 %v512
    %v1144 = vpop.f32.mrf.mxu0
    %v1145 = vadd.f32 0.0, %v1144
    %v1146 = vpop.f32.mrf.mxu0
    %v1147 = vadd.f32 0.0, %v1146
    %1148 = vmatmul.bf16.gmra.mxu0 %v513
    %v1149 = vpop.f32.mrf.mxu0
    %v1150 = vadd.f32 0.0, %v1149
    %v1151 = vpop.f32.mrf.mxu0
    %v1152 = vadd.f32 0.0, %v1151
    %1153 = vmatmul.bf16.gmra.mxu0 %v514
    %v1154 = vpop.f32.mrf.mxu0
    %v1155 = vadd.f32 0.0, %v1154
    %v1156 = vpop.f32.mrf.mxu0
    %v1157 = vadd.f32 0.0, %v1156
    %1158 = vmatmul.bf16.gmra.mxu0 %v515
    %v1159 = vpop.f32.mrf.mxu0
    %v1160 = vadd.f32 0.0, %v1159
    %v1161 = vpop.f32.mrf.mxu0
    %v1162 = vadd.f32 0.0, %v1161
    %1163 = vmatmul.bf16.gmra.mxu0 %v516
    %v1164 = vpop.f32.mrf.mxu0
    %v1165 = vadd.f32 0.0, %v1164
    %v1166 = vpop.f32.mrf.mxu0
    %v1167 = vadd.f32 0.0, %v1166
    %1168 = vmatmul.bf16.gmra.mxu0 %v517
    %v1169 = vpop.f32.mrf.mxu0
    %v1170 = vadd.f32 0.0, %v1169
    %v1171 = vpop.f32.mrf.mxu0
    %v1172 = vadd.f32 0.0, %v1171
    %1173 = vmatmul.bf16.gmra.mxu0 %v518
    %v1174 = vpop.f32.mrf.mxu0
    %v1175 = vadd.f32 0.0, %v1174
    %v1176 = vpop.f32.mrf.mxu0
    %v1177 = vadd.f32 0.0, %v1176
    %1178 = vmatmul.bf16.gmra.mxu0 %v519
    %v1179 = vpop.f32.mrf.mxu0
    %v1180 = vadd.f32 0.0, %v1179
    %v1181 = vpop.f32.mrf.mxu0
    %v1182 = vadd.f32 0.0, %v1181
    %1183 = vmatmul.bf16.gmra.mxu0 %v520
    %v1184 = vpop.f32.mrf.mxu0
    %v1185 = vadd.f32 0.0, %v1184
    %v1186 = vpop.f32.mrf.mxu0
    %v1187 = vadd.f32 0.0, %v1186
    %1188 = vmatmul.bf16.gmra.mxu0 %v521
    %v1189 = vpop.f32.mrf.mxu0
    %v1190 = vadd.f32 0.0, %v1189
    %v1191 = vpop.f32.mrf.mxu0
    %v1192 = vadd.f32 0.0, %v1191
    %1193 = vmatmul.bf16.gmra.mxu0 %v522
    %v1194 = vpop.f32.mrf.mxu0
    %v1195 = vadd.f32 0.0, %v1194
    %v1196 = vpop.f32.mrf.mxu0
    %v1197 = vadd.f32 0.0, %v1196
    %1198 = vmatmul.bf16.gmra.mxu0 %v523
    %v1199 = vpop.f32.mrf.mxu0
    %v1200 = vadd.f32 0.0, %v1199
    %v1201 = vpop.f32.mrf.mxu0
    %v1202 = vadd.f32 0.0, %v1201
    %1203 = vmatmul.bf16.gmra.mxu0 %v524
    %v1204 = vpop.f32.mrf.mxu0
    %v1205 = vadd.f32 0.0, %v1204
    %v1206 = vpop.f32.mrf.mxu0
    %v1207 = vadd.f32 0.0, %v1206
    %1208 = vmatmul.bf16.gmra.mxu0 %v525
    %v1209 = vpop.f32.mrf.mxu0
    %v1210 = vadd.f32 0.0, %v1209
    %v1211 = vpop.f32.mrf.mxu0
    %v1212 = vadd.f32 0.0, %v1211
    %1213 = vmatmul.bf16.gmra.mxu0 %v526
    %v1214 = vpop.f32.mrf.mxu0
    %v1215 = vadd.f32 0.0, %v1214
    %v1216 = vpop.f32.mrf.mxu0
    %v1217 = vadd.f32 0.0, %v1216
    %1218 = vmatmul.bf16.gmra.mxu0 %v527
    %v1219 = vpop.f32.mrf.mxu0
    %v1220 = vadd.f32 0.0, %v1219
    %v1221 = vpop.f32.mrf.mxu0
    %v1222 = vadd.f32 0.0, %v1221
    %1223 = vmatmul.bf16.gmra.mxu0 %v528
    %v1224 = vpop.f32.mrf.mxu0
    %v1225 = vadd.f32 0.0, %v1224
    %v1226 = vpop.f32.mrf.mxu0
    %v1227 = vadd.f32 0.0, %v1226
    %1228 = vmatmul.bf16.gmra.mxu0 %v529
    %v1229 = vpop.f32.mrf.mxu0
    %v1230 = vadd.f32 0.0, %v1229
    %v1231 = vpop.f32.mrf.mxu0
    %v1232 = vadd.f32 0.0, %v1231
    %1233 = vmatmul.bf16.gmra.mxu0 %v530
    %v1234 = vpop.f32.mrf.mxu0
    %v1235 = vadd.f32 0.0, %v1234
    %v1236 = vpop.f32.mrf.mxu0
    %v1237 = vadd.f32 0.0, %v1236
    %1238 = vdwg.mxu0
    %1239 = vmatpush.bf16.msra.mxu0 %v304
    %1240 = vmatpush.bf16.msra.mxu0 %v297
    %1241 = vmatpush.bf16.msra.mxu0 %v290
    %1242 = vmatpush.bf16.msra.mxu0 %v283
    %1243 = vmatpush.bf16.msra.mxu0 %v276
    %1244 = vmatpush.bf16.msra.mxu0 %v269
    %1245 = vmatpush.bf16.msra.mxu0 %v262
    %1246 = vmatpush.bf16.msra.mxu0 %v255
    %1247 = vmatmul.bf16.gmra.mxu0 %v499
    %v1248 = vpop.f32.mrf.mxu0
    %v1249 = vadd.f32 0.0, %v1248
    %v1250 = vpop.f32.mrf.mxu0
    %v1251 = vadd.f32 0.0, %v1250
    %1252 = vmatmul.bf16.gmra.mxu0 %v500
    %v1253 = vpop.f32.mrf.mxu0
    %v1254 = vadd.f32 0.0, %v1253
    %v1255 = vpop.f32.mrf.mxu0
    %v1256 = vadd.f32 0.0, %v1255
    %1257 = vmatmul.bf16.gmra.mxu0 %v501
    %v1258 = vpop.f32.mrf.mxu0
    %v1259 = vadd.f32 0.0, %v1258
    %v1260 = vpop.f32.mrf.mxu0
    %v1261 = vadd.f32 0.0, %v1260
    %1262 = vmatmul.bf16.gmra.mxu0 %v502
    %v1263 = vpop.f32.mrf.mxu0
    %v1264 = vadd.f32 0.0, %v1263
    %v1265 = vpop.f32.mrf.mxu0
    %v1266 = vadd.f32 0.0, %v1265
    %1267 = vmatmul.bf16.gmra.mxu0 %v503
    %v1268 = vpop.f32.mrf.mxu0
    %v1269 = vadd.f32 0.0, %v1268
    %v1270 = vpop.f32.mrf.mxu0
    %v1271 = vadd.f32 0.0, %v1270
    %1272 = vmatmul.bf16.gmra.mxu0 %v504
    %v1273 = vpop.f32.mrf.mxu0
    %v1274 = vadd.f32 0.0, %v1273
    %v1275 = vpop.f32.mrf.mxu0
    %v1276 = vadd.f32 0.0, %v1275
    %1277 = vmatmul.bf16.gmra.mxu0 %v505
    %v1278 = vpop.f32.mrf.mxu0
    %v1279 = vadd.f32 0.0, %v1278
    %v1280 = vpop.f32.mrf.mxu0
    %v1281 = vadd.f32 0.0, %v1280
    %1282 = vmatmul.bf16.gmra.mxu0 %v506
    %v1283 = vpop.f32.mrf.mxu0
    %v1284 = vadd.f32 0.0, %v1283
    %v1285 = vpop.f32.mrf.mxu0
    %v1286 = vadd.f32 0.0, %v1285
    %1287 = vmatmul.bf16.gmra.mxu0 %v507
    %v1288 = vpop.f32.mrf.mxu0
    %v1289 = vadd.f32 0.0, %v1288
    %v1290 = vpop.f32.mrf.mxu0
    %v1291 = vadd.f32 0.0, %v1290
    %1292 = vmatmul.bf16.gmra.mxu0 %v508
    %v1293 = vpop.f32.mrf.mxu0
    %v1294 = vadd.f32 0.0, %v1293
    %v1295 = vpop.f32.mrf.mxu0
    %v1296 = vadd.f32 0.0, %v1295
    %1297 = vmatmul.bf16.gmra.mxu0 %v509
    %v1298 = vpop.f32.mrf.mxu0
    %v1299 = vadd.f32 0.0, %v1298
    %v1300 = vpop.f32.mrf.mxu0
    %v1301 = vadd.f32 0.0, %v1300
    %1302 = vmatmul.bf16.gmra.mxu0 %v510
    %v1303 = vpop.f32.mrf.mxu0
    %v1304 = vadd.f32 0.0, %v1303
    %v1305 = vpop.f32.mrf.mxu0
    %v1306 = vadd.f32 0.0, %v1305
    %1307 = vmatmul.bf16.gmra.mxu0 %v511
    %v1308 = vpop.f32.mrf.mxu0
    %v1309 = vadd.f32 0.0, %v1308
    %v1310 = vpop.f32.mrf.mxu0
    %v1311 = vadd.f32 0.0, %v1310
    %1312 = vmatmul.bf16.gmra.mxu0 %v512
    %v1313 = vpop.f32.mrf.mxu0
    %v1314 = vadd.f32 0.0, %v1313
    %v1315 = vpop.f32.mrf.mxu0
    %v1316 = vadd.f32 0.0, %v1315
    %1317 = vmatmul.bf16.gmra.mxu0 %v513
    %v1318 = vpop.f32.mrf.mxu0
    %v1319 = vadd.f32 0.0, %v1318
    %v1320 = vpop.f32.mrf.mxu0
    %v1321 = vadd.f32 0.0, %v1320
    %1322 = vmatmul.bf16.gmra.mxu0 %v514
    %v1323 = vpop.f32.mrf.mxu0
    %v1324 = vadd.f32 0.0, %v1323
    %v1325 = vpop.f32.mrf.mxu0
    %v1326 = vadd.f32 0.0, %v1325
    %1327 = vmatmul.bf16.gmra.mxu0 %v515
    %v1328 = vpop.f32.mrf.mxu0
    %v1329 = vadd.f32 0.0, %v1328
    %v1330 = vpop.f32.mrf.mxu0
    %v1331 = vadd.f32 0.0, %v1330
    %1332 = vmatmul.bf16.gmra.mxu0 %v516
    %v1333 = vpop.f32.mrf.mxu0
    %v1334 = vadd.f32 0.0, %v1333
    %v1335 = vpop.f32.mrf.mxu0
    %v1336 = vadd.f32 0.0, %v1335
    %1337 = vmatmul.bf16.gmra.mxu0 %v517
    %v1338 = vpop.f32.mrf.mxu0
    %v1339 = vadd.f32 0.0, %v1338
    %v1340 = vpop.f32.mrf.mxu0
    %v1341 = vadd.f32 0.0, %v1340
    %1342 = vmatmul.bf16.gmra.mxu0 %v518
    %v1343 = vpop.f32.mrf.mxu0
    %v1344 = vadd.f32 0.0, %v1343
    %v1345 = vpop.f32.mrf.mxu0
    %v1346 = vadd.f32 0.0, %v1345
    %1347 = vmatmul.bf16.gmra.mxu0 %v519
    %v1348 = vpop.f32.mrf.mxu0
    %v1349 = vadd.f32 0.0, %v1348
    %v1350 = vpop.f32.mrf.mxu0
    %v1351 = vadd.f32 0.0, %v1350
    %1352 = vmatmul.bf16.gmra.mxu0 %v520
    %v1353 = vpop.f32.mrf.mxu0
    %v1354 = vadd.f32 0.0, %v1353
    %v1355 = vpop.f32.mrf.mxu0
    %v1356 = vadd.f32 0.0, %v1355
    %1357 = vmatmul.bf16.gmra.mxu0 %v521
    %v1358 = vpop.f32.mrf.mxu0
    %v1359 = vadd.f32 0.0, %v1358
    %v1360 = vpop.f32.mrf.mxu0
    %v1361 = vadd.f32 0.0, %v1360
    %1362 = vmatmul.bf16.gmra.mxu0 %v522
    %v1363 = vpop.f32.mrf.mxu0
    %v1364 = vadd.f32 0.0, %v1363
    %v1365 = vpop.f32.mrf.mxu0
    %v1366 = vadd.f32 0.0, %v1365
    %1367 = vmatmul.bf16.gmra.mxu0 %v523
    %v1368 = vpop.f32.mrf.mxu0
    %v1369 = vadd.f32 0.0, %v1368
    %v1370 = vpop.f32.mrf.mxu0
    %v1371 = vadd.f32 0.0, %v1370
    %1372 = vmatmul.bf16.gmra.mxu0 %v524
    %v1373 = vpop.f32.mrf.mxu0
    %v1374 = vadd.f32 0.0, %v1373
    %v1375 = vpop.f32.mrf.mxu0
    %v1376 = vadd.f32 0.0, %v1375
    %1377 = vmatmul.bf16.gmra.mxu0 %v525
    %v1378 = vpop.f32.mrf.mxu0
    %v1379 = vadd.f32 0.0, %v1378
    %v1380 = vpop.f32.mrf.mxu0
    %v1381 = vadd.f32 0.0, %v1380
    %1382 = vmatmul.bf16.gmra.mxu0 %v526
    %v1383 = vpop.f32.mrf.mxu0
    %v1384 = vadd.f32 0.0, %v1383
    %v1385 = vpop.f32.mrf.mxu0
    %v1386 = vadd.f32 0.0, %v1385
    %1387 = vmatmul.bf16.gmra.mxu0 %v527
    %v1388 = vpop.f32.mrf.mxu0
    %v1389 = vadd.f32 0.0, %v1388
    %v1390 = vpop.f32.mrf.mxu0
    %v1391 = vadd.f32 0.0, %v1390
    %1392 = vmatmul.bf16.gmra.mxu0 %v528
    %v1393 = vpop.f32.mrf.mxu0
    %v1394 = vadd.f32 0.0, %v1393
    %v1395 = vpop.f32.mrf.mxu0
    %v1396 = vadd.f32 0.0, %v1395
    %1397 = vmatmul.bf16.gmra.mxu0 %v529
    %v1398 = vpop.f32.mrf.mxu0
    %v1399 = vadd.f32 0.0, %v1398
    %v1400 = vpop.f32.mrf.mxu0
    %v1401 = vadd.f32 0.0, %v1400
    %1402 = vmatmul.bf16.gmra.mxu0 %v530
    %v1403 = vpop.f32.mrf.mxu0
    %v1404 = vadd.f32 0.0, %v1403
    %v1405 = vpop.f32.mrf.mxu0
    %v1406 = vadd.f32 0.0, %v1405
    %1407 = vdwg.mxu0
    %1408 = vmatpush.bf16.msra.mxu0 %v305
    %1409 = vmatpush.bf16.msra.mxu0 %v298
    %1410 = vmatpush.bf16.msra.mxu0 %v291
    %1411 = vmatpush.bf16.msra.mxu0 %v284
    %1412 = vmatpush.bf16.msra.mxu0 %v277
    %1413 = vmatpush.bf16.msra.mxu0 %v270
    %1414 = vmatpush.bf16.msra.mxu0 %v263
    %1415 = vmatpush.bf16.msra.mxu0 %v256
    %1416 = vmatmul.bf16.gmra.mxu0 %v499
    %v1417 = vpop.f32.mrf.mxu0
    %v1418 = vadd.f32 0.0, %v1417
    %v1419 = vpop.f32.mrf.mxu0
    %v1420 = vadd.f32 0.0, %v1419
    %1421 = vmatmul.bf16.gmra.mxu0 %v500
    %v1422 = vpop.f32.mrf.mxu0
    %v1423 = vadd.f32 0.0, %v1422
    %v1424 = vpop.f32.mrf.mxu0
    %v1425 = vadd.f32 0.0, %v1424
    %1426 = vmatmul.bf16.gmra.mxu0 %v501
    %v1427 = vpop.f32.mrf.mxu0
    %v1428 = vadd.f32 0.0, %v1427
    %v1429 = vpop.f32.mrf.mxu0
    %v1430 = vadd.f32 0.0, %v1429
    %1431 = vmatmul.bf16.gmra.mxu0 %v502
    %v1432 = vpop.f32.mrf.mxu0
    %v1433 = vadd.f32 0.0, %v1432
    %v1434 = vpop.f32.mrf.mxu0
    %v1435 = vadd.f32 0.0, %v1434
    %1436 = vmatmul.bf16.gmra.mxu0 %v503
    %v1437 = vpop.f32.mrf.mxu0
    %v1438 = vadd.f32 0.0, %v1437
    %v1439 = vpop.f32.mrf.mxu0
    %v1440 = vadd.f32 0.0, %v1439
    %1441 = vmatmul.bf16.gmra.mxu0 %v504
    %v1442 = vpop.f32.mrf.mxu0
    %v1443 = vadd.f32 0.0, %v1442
    %v1444 = vpop.f32.mrf.mxu0
    %v1445 = vadd.f32 0.0, %v1444
    %1446 = vmatmul.bf16.gmra.mxu0 %v505
    %v1447 = vpop.f32.mrf.mxu0
    %v1448 = vadd.f32 0.0, %v1447
    %v1449 = vpop.f32.mrf.mxu0
    %v1450 = vadd.f32 0.0, %v1449
    %1451 = vmatmul.bf16.gmra.mxu0 %v506
    %v1452 = vpop.f32.mrf.mxu0
    %v1453 = vadd.f32 0.0, %v1452
    %v1454 = vpop.f32.mrf.mxu0
    %v1455 = vadd.f32 0.0, %v1454
    %1456 = vmatmul.bf16.gmra.mxu0 %v507
    %v1457 = vpop.f32.mrf.mxu0
    %v1458 = vadd.f32 0.0, %v1457
    %v1459 = vpop.f32.mrf.mxu0
    %v1460 = vadd.f32 0.0, %v1459
    %1461 = vmatmul.bf16.gmra.mxu0 %v508
    %v1462 = vpop.f32.mrf.mxu0
    %v1463 = vadd.f32 0.0, %v1462
    %v1464 = vpop.f32.mrf.mxu0
    %v1465 = vadd.f32 0.0, %v1464
    %1466 = vmatmul.bf16.gmra.mxu0 %v509
    %v1467 = vpop.f32.mrf.mxu0
    %v1468 = vadd.f32 0.0, %v1467
    %v1469 = vpop.f32.mrf.mxu0
    %v1470 = vadd.f32 0.0, %v1469
    %1471 = vmatmul.bf16.gmra.mxu0 %v510
    %v1472 = vpop.f32.mrf.mxu0
    %v1473 = vadd.f32 0.0, %v1472
    %v1474 = vpop.f32.mrf.mxu0
    %v1475 = vadd.f32 0.0, %v1474
    %1476 = vmatmul.bf16.gmra.mxu0 %v511
    %v1477 = vpop.f32.mrf.mxu0
    %v1478 = vadd.f32 0.0, %v1477
    %v1479 = vpop.f32.mrf.mxu0
    %v1480 = vadd.f32 0.0, %v1479
    %1481 = vmatmul.bf16.gmra.mxu0 %v512
    %v1482 = vpop.f32.mrf.mxu0
    %v1483 = vadd.f32 0.0, %v1482
    %v1484 = vpop.f32.mrf.mxu0
    %v1485 = vadd.f32 0.0, %v1484
    %1486 = vmatmul.bf16.gmra.mxu0 %v513
    %v1487 = vpop.f32.mrf.mxu0
    %v1488 = vadd.f32 0.0, %v1487
    %v1489 = vpop.f32.mrf.mxu0
    %v1490 = vadd.f32 0.0, %v1489
    %1491 = vmatmul.bf16.gmra.mxu0 %v514
    %v1492 = vpop.f32.mrf.mxu0
    %v1493 = vadd.f32 0.0, %v1492
    %v1494 = vpop.f32.mrf.mxu0
    %v1495 = vadd.f32 0.0, %v1494
    %1496 = vmatmul.bf16.gmra.mxu0 %v515
    %v1497 = vpop.f32.mrf.mxu0
    %v1498 = vadd.f32 0.0, %v1497
    %v1499 = vpop.f32.mrf.mxu0
    %v1500 = vadd.f32 0.0, %v1499
    %1501 = vmatmul.bf16.gmra.mxu0 %v516
    %v1502 = vpop.f32.mrf.mxu0
    %v1503 = vadd.f32 0.0, %v1502
    %v1504 = vpop.f32.mrf.mxu0
    %v1505 = vadd.f32 0.0, %v1504
    %1506 = vmatmul.bf16.gmra.mxu0 %v517
    %v1507 = vpop.f32.mrf.mxu0
    %v1508 = vadd.f32 0.0, %v1507
    %v1509 = vpop.f32.mrf.mxu0
    %v1510 = vadd.f32 0.0, %v1509
    %1511 = vmatmul.bf16.gmra.mxu0 %v518
    %v1512 = vpop.f32.mrf.mxu0
    %v1513 = vadd.f32 0.0, %v1512
    %v1514 = vpop.f32.mrf.mxu0
    %v1515 = vadd.f32 0.0, %v1514
    %1516 = vmatmul.bf16.gmra.mxu0 %v519
    %v1517 = vpop.f32.mrf.mxu0
    %v1518 = vadd.f32 0.0, %v1517
    %v1519 = vpop.f32.mrf.mxu0
    %v1520 = vadd.f32 0.0, %v1519
    %1521 = vmatmul.bf16.gmra.mxu0 %v520
    %v1522 = vpop.f32.mrf.mxu0
    %v1523 = vadd.f32 0.0, %v1522
    %v1524 = vpop.f32.mrf.mxu0
    %v1525 = vadd.f32 0.0, %v1524
    %1526 = vmatmul.bf16.gmra.mxu0 %v521
    %v1527 = vpop.f32.mrf.mxu0
    %v1528 = vadd.f32 0.0, %v1527
    %v1529 = vpop.f32.mrf.mxu0
    %v1530 = vadd.f32 0.0, %v1529
    %1531 = vmatmul.bf16.gmra.mxu0 %v522
    %v1532 = vpop.f32.mrf.mxu0
    %v1533 = vadd.f32 0.0, %v1532
    %v1534 = vpop.f32.mrf.mxu0
    %v1535 = vadd.f32 0.0, %v1534
    %1536 = vmatmul.bf16.gmra.mxu0 %v523
    %v1537 = vpop.f32.mrf.mxu0
    %v1538 = vadd.f32 0.0, %v1537
    %v1539 = vpop.f32.mrf.mxu0
    %v1540 = vadd.f32 0.0, %v1539
    %1541 = vmatmul.bf16.gmra.mxu0 %v524
    %v1542 = vpop.f32.mrf.mxu0
    %v1543 = vadd.f32 0.0, %v1542
    %v1544 = vpop.f32.mrf.mxu0
    %v1545 = vadd.f32 0.0, %v1544
    %1546 = vmatmul.bf16.gmra.mxu0 %v525
    %v1547 = vpop.f32.mrf.mxu0
    %v1548 = vadd.f32 0.0, %v1547
    %v1549 = vpop.f32.mrf.mxu0
    %v1550 = vadd.f32 0.0, %v1549
    %1551 = vmatmul.bf16.gmra.mxu0 %v526
    %v1552 = vpop.f32.mrf.mxu0
    %v1553 = vadd.f32 0.0, %v1552
    %v1554 = vpop.f32.mrf.mxu0
    %v1555 = vadd.f32 0.0, %v1554
    %1556 = vmatmul.bf16.gmra.mxu0 %v527
    %v1557 = vpop.f32.mrf.mxu0
    %v1558 = vadd.f32 0.0, %v1557
    %v1559 = vpop.f32.mrf.mxu0
    %v1560 = vadd.f32 0.0, %v1559
    %1561 = vmatmul.bf16.gmra.mxu0 %v528
    %v1562 = vpop.f32.mrf.mxu0
    %v1563 = vadd.f32 0.0, %v1562
    %v1564 = vpop.f32.mrf.mxu0
    %v1565 = vadd.f32 0.0, %v1564
    %1566 = vmatmul.bf16.gmra.mxu0 %v529
    %v1567 = vpop.f32.mrf.mxu0
    %v1568 = vadd.f32 0.0, %v1567
    %v1569 = vpop.f32.mrf.mxu0
    %v1570 = vadd.f32 0.0, %v1569
    %1571 = vmatmul.bf16.gmra.mxu0 %v530
    %v1572 = vpop.f32.mrf.mxu0
    %v1573 = vadd.f32 0.0, %v1572
    %v1574 = vpop.f32.mrf.mxu0
    %v1575 = vadd.f32 0.0, %v1574
    %1576 = vdwg.mxu0
    %1577 = vmatpush.bf16.msra.mxu0 %v306
    %1578 = vmatpush.bf16.msra.mxu0 %v299
    %1579 = vmatpush.bf16.msra.mxu0 %v292
    %1580 = vmatpush.bf16.msra.mxu0 %v285
    %1581 = vmatpush.bf16.msra.mxu0 %v278
    %1582 = vmatpush.bf16.msra.mxu0 %v271
    %1583 = vmatpush.bf16.msra.mxu0 %v264
    %1584 = vmatpush.bf16.msra.mxu0 %v257
    %1585 = vmatmul.bf16.gmra.mxu0 %v499
    %v1586 = vpop.f32.mrf.mxu0
    %v1587 = vadd.f32 0.0, %v1586
    %v1588 = vpop.f32.mrf.mxu0
    %v1589 = vadd.f32 0.0, %v1588
    %1590 = vmatmul.bf16.gmra.mxu0 %v500
    %v1591 = vpop.f32.mrf.mxu0
    %v1592 = vadd.f32 0.0, %v1591
    %v1593 = vpop.f32.mrf.mxu0
    %v1594 = vadd.f32 0.0, %v1593
    %1595 = vmatmul.bf16.gmra.mxu0 %v501
    %v1596 = vpop.f32.mrf.mxu0
    %v1597 = vadd.f32 0.0, %v1596
    %v1598 = vpop.f32.mrf.mxu0
    %v1599 = vadd.f32 0.0, %v1598
    %1600 = vmatmul.bf16.gmra.mxu0 %v502
    %v1601 = vpop.f32.mrf.mxu0
    %v1602 = vadd.f32 0.0, %v1601
    %v1603 = vpop.f32.mrf.mxu0
    %v1604 = vadd.f32 0.0, %v1603
    %1605 = vmatmul.bf16.gmra.mxu0 %v503
    %v1606 = vpop.f32.mrf.mxu0
    %v1607 = vadd.f32 0.0, %v1606
    %v1608 = vpop.f32.mrf.mxu0
    %v1609 = vadd.f32 0.0, %v1608
    %1610 = vmatmul.bf16.gmra.mxu0 %v504
    %v1611 = vpop.f32.mrf.mxu0
    %v1612 = vadd.f32 0.0, %v1611
    %v1613 = vpop.f32.mrf.mxu0
    %v1614 = vadd.f32 0.0, %v1613
    %1615 = vmatmul.bf16.gmra.mxu0 %v505
    %v1616 = vpop.f32.mrf.mxu0
    %v1617 = vadd.f32 0.0, %v1616
    %v1618 = vpop.f32.mrf.mxu0
    %v1619 = vadd.f32 0.0, %v1618
    %1620 = vmatmul.bf16.gmra.mxu0 %v506
    %v1621 = vpop.f32.mrf.mxu0
    %v1622 = vadd.f32 0.0, %v1621
    %v1623 = vpop.f32.mrf.mxu0
    %v1624 = vadd.f32 0.0, %v1623
    %1625 = vmatmul.bf16.gmra.mxu0 %v507
    %v1626 = vpop.f32.mrf.mxu0
    %v1627 = vadd.f32 0.0, %v1626
    %v1628 = vpop.f32.mrf.mxu0
    %v1629 = vadd.f32 0.0, %v1628
    %1630 = vmatmul.bf16.gmra.mxu0 %v508
    %v1631 = vpop.f32.mrf.mxu0
    %v1632 = vadd.f32 0.0, %v1631
    %v1633 = vpop.f32.mrf.mxu0
    %v1634 = vadd.f32 0.0, %v1633
    %1635 = vmatmul.bf16.gmra.mxu0 %v509
    %v1636 = vpop.f32.mrf.mxu0
    %v1637 = vadd.f32 0.0, %v1636
    %v1638 = vpop.f32.mrf.mxu0
    %v1639 = vadd.f32 0.0, %v1638
    %1640 = vmatmul.bf16.gmra.mxu0 %v510
    %v1641 = vpop.f32.mrf.mxu0
    %v1642 = vadd.f32 0.0, %v1641
    %v1643 = vpop.f32.mrf.mxu0
    %v1644 = vadd.f32 0.0, %v1643
    %1645 = vmatmul.bf16.gmra.mxu0 %v511
    %v1646 = vpop.f32.mrf.mxu0
    %v1647 = vadd.f32 0.0, %v1646
    %v1648 = vpop.f32.mrf.mxu0
    %v1649 = vadd.f32 0.0, %v1648
    %1650 = vmatmul.bf16.gmra.mxu0 %v512
    %v1651 = vpop.f32.mrf.mxu0
    %v1652 = vadd.f32 0.0, %v1651
    %v1653 = vpop.f32.mrf.mxu0
    %v1654 = vadd.f32 0.0, %v1653
    %1655 = vmatmul.bf16.gmra.mxu0 %v513
    %v1656 = vpop.f32.mrf.mxu0
    %v1657 = vadd.f32 0.0, %v1656
    %v1658 = vpop.f32.mrf.mxu0
    %v1659 = vadd.f32 0.0, %v1658
    %1660 = vmatmul.bf16.gmra.mxu0 %v514
    %v1661 = vpop.f32.mrf.mxu0
    %v1662 = vadd.f32 0.0, %v1661
    %v1663 = vpop.f32.mrf.mxu0
    %v1664 = vadd.f32 0.0, %v1663
    %1665 = vmatmul.bf16.gmra.mxu0 %v515
    %v1666 = vpop.f32.mrf.mxu0
    %v1667 = vadd.f32 0.0, %v1666
    %v1668 = vpop.f32.mrf.mxu0
    %v1669 = vadd.f32 0.0, %v1668
    %1670 = vmatmul.bf16.gmra.mxu0 %v516
    %v1671 = vpop.f32.mrf.mxu0
    %v1672 = vadd.f32 0.0, %v1671
    %v1673 = vpop.f32.mrf.mxu0
    %v1674 = vadd.f32 0.0, %v1673
    %1675 = vmatmul.bf16.gmra.mxu0 %v517
    %v1676 = vpop.f32.mrf.mxu0
    %v1677 = vadd.f32 0.0, %v1676
    %v1678 = vpop.f32.mrf.mxu0
    %v1679 = vadd.f32 0.0, %v1678
    %1680 = vmatmul.bf16.gmra.mxu0 %v518
    %v1681 = vpop.f32.mrf.mxu0
    %v1682 = vadd.f32 0.0, %v1681
    %v1683 = vpop.f32.mrf.mxu0
    %v1684 = vadd.f32 0.0, %v1683
    %1685 = vmatmul.bf16.gmra.mxu0 %v519
    %v1686 = vpop.f32.mrf.mxu0
    %v1687 = vadd.f32 0.0, %v1686
    %v1688 = vpop.f32.mrf.mxu0
    %v1689 = vadd.f32 0.0, %v1688
    %1690 = vmatmul.bf16.gmra.mxu0 %v520
    %v1691 = vpop.f32.mrf.mxu0
    %v1692 = vadd.f32 0.0, %v1691
    %v1693 = vpop.f32.mrf.mxu0
    %v1694 = vadd.f32 0.0, %v1693
    %1695 = vmatmul.bf16.gmra.mxu0 %v521
    %v1696 = vpop.f32.mrf.mxu0
    %v1697 = vadd.f32 0.0, %v1696
    %v1698 = vpop.f32.mrf.mxu0
    %v1699 = vadd.f32 0.0, %v1698
    %1700 = vmatmul.bf16.gmra.mxu0 %v522
    %v1701 = vpop.f32.mrf.mxu0
    %v1702 = vadd.f32 0.0, %v1701
    %v1703 = vpop.f32.mrf.mxu0
    %v1704 = vadd.f32 0.0, %v1703
    %1705 = vmatmul.bf16.gmra.mxu0 %v523
    %v1706 = vpop.f32.mrf.mxu0
    %v1707 = vadd.f32 0.0, %v1706
    %v1708 = vpop.f32.mrf.mxu0
    %v1709 = vadd.f32 0.0, %v1708
    %1710 = vmatmul.bf16.gmra.mxu0 %v524
    %v1711 = vpop.f32.mrf.mxu0
    %v1712 = vadd.f32 0.0, %v1711
    %v1713 = vpop.f32.mrf.mxu0
    %v1714 = vadd.f32 0.0, %v1713
    %1715 = vmatmul.bf16.gmra.mxu0 %v525
    %v1716 = vpop.f32.mrf.mxu0
    %v1717 = vadd.f32 0.0, %v1716
    %v1718 = vpop.f32.mrf.mxu0
    %v1719 = vadd.f32 0.0, %v1718
    %1720 = vmatmul.bf16.gmra.mxu0 %v526
    %v1721 = vpop.f32.mrf.mxu0
    %v1722 = vadd.f32 0.0, %v1721
    %v1723 = vpop.f32.mrf.mxu0
    %v1724 = vadd.f32 0.0, %v1723
    %1725 = vmatmul.bf16.gmra.mxu0 %v527
    %v1726 = vpop.f32.mrf.mxu0
    %v1727 = vadd.f32 0.0, %v1726
    %v1728 = vpop.f32.mrf.mxu0
    %v1729 = vadd.f32 0.0, %v1728
    %1730 = vmatmul.bf16.gmra.mxu0 %v528
    %v1731 = vpop.f32.mrf.mxu0
    %v1732 = vadd.f32 0.0, %v1731
    %v1733 = vpop.f32.mrf.mxu0
    %v1734 = vadd.f32 0.0, %v1733
    %1735 = vmatmul.bf16.gmra.mxu0 %v529
    %v1736 = vpop.f32.mrf.mxu0
    %v1737 = vadd.f32 0.0, %v1736
    %v1738 = vpop.f32.mrf.mxu0
    %v1739 = vadd.f32 0.0, %v1738
    %1740 = vmatmul.bf16.gmra.mxu0 %v530
    %v1741 = vpop.f32.mrf.mxu0
    %v1742 = vadd.f32 0.0, %v1741
    %v1743 = vpop.f32.mrf.mxu0
    %v1744 = vadd.f32 0.0, %v1743
    %1745 = vdwg.mxu0
    %1746 = vst [vmem:[%s2] sm:$0xff] %v573
    %1747 = vst [vmem:[%s2 + $0x8] sm:$0xff] %v742
    %1748 = vst [vmem:[%s2 + $0x10] sm:$0xff] %v911
    %1749 = vst [vmem:[%s2 + $0x18] sm:$0xff] %v1080
    %1750 = vst [vmem:[%s2 + $0x20] sm:$0xff] %v1249
    %1751 = vst [vmem:[%s2 + $0x28] sm:$0xff] %v1418
    %vm1752 = vcmask 130048
    %1753 = vst.msk [vmem:[%s2 + $0x30] sm:$0xff] %vm1752, %v1587
    %1754 = vst [vmem:[%s2 + $0x38] sm:$0xff] %v575
    %1755 = vst [vmem:[%s2 + $0x40] sm:$0xff] %v744
    %1756 = vst [vmem:[%s2 + $0x48] sm:$0xff] %v913
    %1757 = vst [vmem:[%s2 + $0x50] sm:$0xff] %v1082
    %1758 = vst [vmem:[%s2 + $0x58] sm:$0xff] %v1251
    %1759 = vst [vmem:[%s2 + $0x60] sm:$0xff] %v1420
    %1760 = vst.msk [vmem:[%s2 + $0x68] sm:$0xff] %vm1752, %v1589
    %1761 = vst [vmem:[%s2 + $0x70] sm:$0xff] %v578
    %1762 = vst [vmem:[%s2 + $0x78] sm:$0xff] %v747
    %1763 = vst [vmem:[%s2 + $0x80] sm:$0xff] %v916
    %1764 = vst [vmem:[%s2 + $0x88] sm:$0xff] %v1085
    %1765 = vst [vmem:[%s2 + $0x90] sm:$0xff] %v1254
    %1766 = vst [vmem:[%s2 + $0x98] sm:$0xff] %v1423
    %1767 = vst.msk [vmem:[%s2 + $0xa0] sm:$0xff] %vm1752, %v1592
    %1768 = vst [vmem:[%s2 + $0xa8] sm:$0xff] %v580
    %1769 = vst [vmem:[%s2 + $0xb0] sm:$0xff] %v749
    %1770 = vst [vmem:[%s2 + $0xb8] sm:$0xff] %v918
    %1771 = vst [vmem:[%s2 + $0xc0] sm:$0xff] %v1087
    %1772 = vst [vmem:[%s2 + $0xc8] sm:$0xff] %v1256
    %1773 = vst [vmem:[%s2 + $0xd0] sm:$0xff] %v1425
    %1774 = vst.msk [vmem:[%s2 + $0xd8] sm:$0xff] %vm1752, %v1594
    %1775 = vst [vmem:[%s2 + $0xe0] sm:$0xff] %v583
    %1776 = vst [vmem:[%s2 + $0xe8] sm:$0xff] %v752
    %1777 = vst [vmem:[%s2 + $0xf0] sm:$0xff] %v921
    %1778 = vst [vmem:[%s2 + $0xf8] sm:$0xff] %v1090
    %1779 = vst [vmem:[%s2 + $0x100] sm:$0xff] %v1259
    %1780 = vst [vmem:[%s2 + $0x108] sm:$0xff] %v1428
    %1781 = vst.msk [vmem:[%s2 + $0x110] sm:$0xff] %vm1752, %v1597
    %1782 = vst [vmem:[%s2 + $0x118] sm:$0xff] %v585
    %1783 = vst [vmem:[%s2 + $0x120] sm:$0xff] %v754
    %1784 = vst [vmem:[%s2 + $0x128] sm:$0xff] %v923
    %1785 = vst [vmem:[%s2 + $0x130] sm:$0xff] %v1092
    %1786 = vst [vmem:[%s2 + $0x138] sm:$0xff] %v1261
    %1787 = vst [vmem:[%s2 + $0x140] sm:$0xff] %v1430
    %1788 = vst.msk [vmem:[%s2 + $0x148] sm:$0xff] %vm1752, %v1599
    %1789 = vst [vmem:[%s2 + $0x150] sm:$0xff] %v588
    %1790 = vst [vmem:[%s2 + $0x158] sm:$0xff] %v757
    %1791 = vst [vmem:[%s2 + $0x160] sm:$0xff] %v926
    %1792 = vst [vmem:[%s2 + $0x168] sm:$0xff] %v1095
    %1793 = vst [vmem:[%s2 + $0x170] sm:$0xff] %v1264
    %1794 = vst [vmem:[%s2 + $0x178] sm:$0xff] %v1433
    %1795 = vst.msk [vmem:[%s2 + $0x180] sm:$0xff] %vm1752, %v1602
    %1796 = vst [vmem:[%s2 + $0x188] sm:$0xff] %v590
    %1797 = vst [vmem:[%s2 + $0x190] sm:$0xff] %v759
    %1798 = vst [vmem:[%s2 + $0x198] sm:$0xff] %v928
    %1799 = vst [vmem:[%s2 + $0x1a0] sm:$0xff] %v1097
    %1800 = vst [vmem:[%s2 + $0x1a8] sm:$0xff] %v1266
    %1801 = vst [vmem:[%s2 + $0x1b0] sm:$0xff] %v1435
    %1802 = vst.msk [vmem:[%s2 + $0x1b8] sm:$0xff] %vm1752, %v1604
    %1803 = vst [vmem:[%s2 + $0x1c0] sm:$0xff] %v593
    %1804 = vst [vmem:[%s2 + $0x1c8] sm:$0xff] %v762
    %1805 = vst [vmem:[%s2 + $0x1d0] sm:$0xff] %v931
    %1806 = vst [vmem:[%s2 + $0x1d8] sm:$0xff] %v1100
    %1807 = vst [vmem:[%s2 + $0x1e0] sm:$0xff] %v1269
    %1808 = vst [vmem:[%s2 + $0x1e8] sm:$0xff] %v1438
    %1809 = vst.msk [vmem:[%s2 + $0x1f0] sm:$0xff] %vm1752, %v1607
    %1810 = vst [vmem:[%s2 + $0x1f8] sm:$0xff] %v595
    %1811 = vst [vmem:[%s2 + $0x200] sm:$0xff] %v764
    %1812 = vst [vmem:[%s2 + $0x208] sm:$0xff] %v933
    %1813 = vst [vmem:[%s2 + $0x210] sm:$0xff] %v1102
    %1814 = vst [vmem:[%s2 + $0x218] sm:$0xff] %v1271
    %1815 = vst [vmem:[%s2 + $0x220] sm:$0xff] %v1440
    %1816 = vst.msk [vmem:[%s2 + $0x228] sm:$0xff] %vm1752, %v1609
    %1817 = vst [vmem:[%s2 + $0x230] sm:$0xff] %v598
    %1818 = vst [vmem:[%s2 + $0x238] sm:$0xff] %v767
    %1819 = vst [vmem:[%s2 + $0x240] sm:$0xff] %v936
    %1820 = vst [vmem:[%s2 + $0x248] sm:$0xff] %v1105
    %1821 = vst [vmem:[%s2 + $0x250] sm:$0xff] %v1274
    %1822 = vst [vmem:[%s2 + $0x258] sm:$0xff] %v1443
    %1823 = vst.msk [vmem:[%s2 + $0x260] sm:$0xff] %vm1752, %v1612
    %1824 = vst [vmem:[%s2 + $0x268] sm:$0xff] %v600
    %1825 = vst [vmem:[%s2 + $0x270] sm:$0xff] %v769
    %1826 = vst [vmem:[%s2 + $0x278] sm:$0xff] %v938
    %1827 = vst [vmem:[%s2 + $0x280] sm:$0xff] %v1107
    %1828 = vst [vmem:[%s2 + $0x288] sm:$0xff] %v1276
    %1829 = vst [vmem:[%s2 + $0x290] sm:$0xff] %v1445
    %1830 = vst.msk [vmem:[%s2 + $0x298] sm:$0xff] %vm1752, %v1614
    %1831 = vst [vmem:[%s2 + $0x2a0] sm:$0xff] %v603
    %1832 = vst [vmem:[%s2 + $0x2a8] sm:$0xff] %v772
    %1833 = vst [vmem:[%s2 + $0x2b0] sm:$0xff] %v941
    %1834 = vst [vmem:[%s2 + $0x2b8] sm:$0xff] %v1110
    %1835 = vst [vmem:[%s2 + $0x2c0] sm:$0xff] %v1279
    %1836 = vst [vmem:[%s2 + $0x2c8] sm:$0xff] %v1448
    %1837 = vst.msk [vmem:[%s2 + $0x2d0] sm:$0xff] %vm1752, %v1617
    %1838 = vst [vmem:[%s2 + $0x2d8] sm:$0xff] %v605
    %1839 = vst [vmem:[%s2 + $0x2e0] sm:$0xff] %v774
    %1840 = vst [vmem:[%s2 + $0x2e8] sm:$0xff] %v943
    %1841 = vst [vmem:[%s2 + $0x2f0] sm:$0xff] %v1112
    %1842 = vst [vmem:[%s2 + $0x2f8] sm:$0xff] %v1281
    %1843 = vst [vmem:[%s2 + $0x300] sm:$0xff] %v1450
    %1844 = vst.msk [vmem:[%s2 + $0x308] sm:$0xff] %vm1752, %v1619
    %1845 = vst [vmem:[%s2 + $0x310] sm:$0xff] %v608
    %1846 = vst [vmem:[%s2 + $0x318] sm:$0xff] %v777
    %1847 = vst [vmem:[%s2 + $0x320] sm:$0xff] %v946
    %1848 = vst [vmem:[%s2 + $0x328] sm:$0xff] %v1115
    %1849 = vst [vmem:[%s2 + $0x330] sm:$0xff] %v1284
    %1850 = vst [vmem:[%s2 + $0x338] sm:$0xff] %v1453
    %1851 = vst.msk [vmem:[%s2 + $0x340] sm:$0xff] %vm1752, %v1622
    %1852 = vst [vmem:[%s2 + $0x348] sm:$0xff] %v610
    %1853 = vst [vmem:[%s2 + $0x350] sm:$0xff] %v779
    %1854 = vst [vmem:[%s2 + $0x358] sm:$0xff] %v948
    %1855 = vst [vmem:[%s2 + $0x360] sm:$0xff] %v1117
    %1856 = vst [vmem:[%s2 + $0x368] sm:$0xff] %v1286
    %1857 = vst [vmem:[%s2 + $0x370] sm:$0xff] %v1455
    %1858 = vst.msk [vmem:[%s2 + $0x378] sm:$0xff] %vm1752, %v1624
    %1859 = vst [vmem:[%s2 + $0x380] sm:$0xff] %v613
    %1860 = vst [vmem:[%s2 + $0x388] sm:$0xff] %v782
    %1861 = vst [vmem:[%s2 + $0x390] sm:$0xff] %v951
    %1862 = vst [vmem:[%s2 + $0x398] sm:$0xff] %v1120
    %1863 = vst [vmem:[%s2 + $0x3a0] sm:$0xff] %v1289
    %1864 = vst [vmem:[%s2 + $0x3a8] sm:$0xff] %v1458
    %1865 = vst.msk [vmem:[%s2 + $0x3b0] sm:$0xff] %vm1752, %v1627
    %1866 = vst [vmem:[%s2 + $0x3b8] sm:$0xff] %v615
    %1867 = vst [vmem:[%s2 + $0x3c0] sm:$0xff] %v784
    %1868 = vst [vmem:[%s2 + $0x3c8] sm:$0xff] %v953
    %1869 = vst [vmem:[%s2 + $0x3d0] sm:$0xff] %v1122
    %1870 = vst [vmem:[%s2 + $0x3d8] sm:$0xff] %v1291
    %1871 = vst [vmem:[%s2 + $0x3e0] sm:$0xff] %v1460
    %1872 = vst.msk [vmem:[%s2 + $0x3e8] sm:$0xff] %vm1752, %v1629
    %1873 = vst [vmem:[%s2 + $0x3f0] sm:$0xff] %v618
    %1874 = vst [vmem:[%s2 + $0x3f8] sm:$0xff] %v787
    %1875 = vst [vmem:[%s2 + $0x400] sm:$0xff] %v956
    %1876 = vst [vmem:[%s2 + $0x408] sm:$0xff] %v1125
    %1877 = vst [vmem:[%s2 + $0x410] sm:$0xff] %v1294
    %1878 = vst [vmem:[%s2 + $0x418] sm:$0xff] %v1463
    %1879 = vst.msk [vmem:[%s2 + $0x420] sm:$0xff] %vm1752, %v1632
    %1880 = vst [vmem:[%s2 + $0x428] sm:$0xff] %v620
    %1881 = vst [vmem:[%s2 + $0x430] sm:$0xff] %v789
    %1882 = vst [vmem:[%s2 + $0x438] sm:$0xff] %v958
    %1883 = vst [vmem:[%s2 + $0x440] sm:$0xff] %v1127
    %1884 = vst [vmem:[%s2 + $0x448] sm:$0xff] %v1296
    %1885 = vst [vmem:[%s2 + $0x450] sm:$0xff] %v1465
    %1886 = vst.msk [vmem:[%s2 + $0x458] sm:$0xff] %vm1752, %v1634
    %1887 = vst [vmem:[%s2 + $0x460] sm:$0xff] %v623
    %1888 = vst [vmem:[%s2 + $0x468] sm:$0xff] %v792
    %1889 = vst [vmem:[%s2 + $0x470] sm:$0xff] %v961
    %1890 = vst [vmem:[%s2 + $0x478] sm:$0xff] %v1130
    %1891 = vst [vmem:[%s2 + $0x480] sm:$0xff] %v1299
    %1892 = vst [vmem:[%s2 + $0x488] sm:$0xff] %v1468
    %1893 = vst.msk [vmem:[%s2 + $0x490] sm:$0xff] %vm1752, %v1637
    %1894 = vst [vmem:[%s2 + $0x498] sm:$0xff] %v625
    %1895 = vst [vmem:[%s2 + $0x4a0] sm:$0xff] %v794
    %1896 = vst [vmem:[%s2 + $0x4a8] sm:$0xff] %v963
    %1897 = vst [vmem:[%s2 + $0x4b0] sm:$0xff] %v1132
    %1898 = vst [vmem:[%s2 + $0x4b8] sm:$0xff] %v1301
    %1899 = vst [vmem:[%s2 + $0x4c0] sm:$0xff] %v1470
    %1900 = vst.msk [vmem:[%s2 + $0x4c8] sm:$0xff] %vm1752, %v1639
    %1901 = vst [vmem:[%s2 + $0x4d0] sm:$0xff] %v628
    %1902 = vst [vmem:[%s2 + $0x4d8] sm:$0xff] %v797
    %1903 = vst [vmem:[%s2 + $0x4e0] sm:$0xff] %v966
    %1904 = vst [vmem:[%s2 + $0x4e8] sm:$0xff] %v1135
    %1905 = vst [vmem:[%s2 + $0x4f0] sm:$0xff] %v1304
    %1906 = vst [vmem:[%s2 + $0x4f8] sm:$0xff] %v1473
    %1907 = vst.msk [vmem:[%s2 + $0x500] sm:$0xff] %vm1752, %v1642
    %1908 = vst [vmem:[%s2 + $0x508] sm:$0xff] %v630
    %1909 = vst [vmem:[%s2 + $0x510] sm:$0xff] %v799
    %1910 = vst [vmem:[%s2 + $0x518] sm:$0xff] %v968
    %1911 = vst [vmem:[%s2 + $0x520] sm:$0xff] %v1137
    %1912 = vst [vmem:[%s2 + $0x528] sm:$0xff] %v1306
    %1913 = vst [vmem:[%s2 + $0x530] sm:$0xff] %v1475
    %1914 = vst.msk [vmem:[%s2 + $0x538] sm:$0xff] %vm1752, %v1644
    %1915 = vst [vmem:[%s2 + $0x540] sm:$0xff] %v633
    %1916 = vst [vmem:[%s2 + $0x548] sm:$0xff] %v802
    %1917 = vst [vmem:[%s2 + $0x550] sm:$0xff] %v971
    %1918 = vst [vmem:[%s2 + $0x558] sm:$0xff] %v1140
    %1919 = vst [vmem:[%s2 + $0x560] sm:$0xff] %v1309
    %1920 = vst [vmem:[%s2 + $0x568] sm:$0xff] %v1478
    %1921 = vst.msk [vmem:[%s2 + $0x570] sm:$0xff] %vm1752, %v1647
    %1922 = vst [vmem:[%s2 + $0x578] sm:$0xff] %v635
    %1923 = vst [vmem:[%s2 + $0x580] sm:$0xff] %v804
    %1924 = vst [vmem:[%s2 + $0x588] sm:$0xff] %v973
    %1925 = vst [vmem:[%s2 + $0x590] sm:$0xff] %v1142
    %1926 = vst [vmem:[%s2 + $0x598] sm:$0xff] %v1311
    %1927 = vst [vmem:[%s2 + $0x5a0] sm:$0xff] %v1480
    %1928 = vst.msk [vmem:[%s2 + $0x5a8] sm:$0xff] %vm1752, %v1649
    %1929 = vst [vmem:[%s2 + $0x5b0] sm:$0xff] %v638
    %1930 = vst [vmem:[%s2 + $0x5b8] sm:$0xff] %v807
    %1931 = vst [vmem:[%s2 + $0x5c0] sm:$0xff] %v976
    %1932 = vst [vmem:[%s2 + $0x5c8] sm:$0xff] %v1145
    %1933 = vst [vmem:[%s2 + $0x5d0] sm:$0xff] %v1314
    %1934 = vst [vmem:[%s2 + $0x5d8] sm:$0xff] %v1483
    %1935 = vst.msk [vmem:[%s2 + $0x5e0] sm:$0xff] %vm1752, %v1652
    %1936 = vst [vmem:[%s2 + $0x5e8] sm:$0xff] %v640
    %1937 = vst [vmem:[%s2 + $0x5f0] sm:$0xff] %v809
    %1938 = vst [vmem:[%s2 + $0x5f8] sm:$0xff] %v978
    %1939 = vst [vmem:[%s2 + $0x600] sm:$0xff] %v1147
    %1940 = vst [vmem:[%s2 + $0x608] sm:$0xff] %v1316
    %1941 = vst [vmem:[%s2 + $0x610] sm:$0xff] %v1485
    %1942 = vst.msk [vmem:[%s2 + $0x618] sm:$0xff] %vm1752, %v1654
    %1943 = vst [vmem:[%s2 + $0x620] sm:$0xff] %v643
    %1944 = vst [vmem:[%s2 + $0x628] sm:$0xff] %v812
    %1945 = vst [vmem:[%s2 + $0x630] sm:$0xff] %v981
    %1946 = vst [vmem:[%s2 + $0x638] sm:$0xff] %v1150
    %1947 = vst [vmem:[%s2 + $0x640] sm:$0xff] %v1319
    %1948 = vst [vmem:[%s2 + $0x648] sm:$0xff] %v1488
    %1949 = vst.msk [vmem:[%s2 + $0x650] sm:$0xff] %vm1752, %v1657
    %1950 = vst [vmem:[%s2 + $0x658] sm:$0xff] %v645
    %1951 = vst [vmem:[%s2 + $0x660] sm:$0xff] %v814
    %1952 = vst [vmem:[%s2 + $0x668] sm:$0xff] %v983
    %1953 = vst [vmem:[%s2 + $0x670] sm:$0xff] %v1152
    %1954 = vst [vmem:[%s2 + $0x678] sm:$0xff] %v1321
    %1955 = vst [vmem:[%s2 + $0x680] sm:$0xff] %v1490
    %1956 = vst.msk [vmem:[%s2 + $0x688] sm:$0xff] %vm1752, %v1659
    %1957 = vst [vmem:[%s2 + $0x690] sm:$0xff] %v648
    %1958 = vst [vmem:[%s2 + $0x698] sm:$0xff] %v817
    %1959 = vst [vmem:[%s2 + $0x6a0] sm:$0xff] %v986
    %1960 = vst [vmem:[%s2 + $0x6a8] sm:$0xff] %v1155
    %1961 = vst [vmem:[%s2 + $0x6b0] sm:$0xff] %v1324
    %1962 = vst [vmem:[%s2 + $0x6b8] sm:$0xff] %v1493
    %1963 = vst.msk [vmem:[%s2 + $0x6c0] sm:$0xff] %vm1752, %v1662
    %1964 = vst [vmem:[%s2 + $0x6c8] sm:$0xff] %v650
    %1965 = vst [vmem:[%s2 + $0x6d0] sm:$0xff] %v819
    %1966 = vst [vmem:[%s2 + $0x6d8] sm:$0xff] %v988
    %1967 = vst [vmem:[%s2 + $0x6e0] sm:$0xff] %v1157
    %1968 = vst [vmem:[%s2 + $0x6e8] sm:$0xff] %v1326
    %1969 = vst [vmem:[%s2 + $0x6f0] sm:$0xff] %v1495
    %1970 = vst.msk [vmem:[%s2 + $0x6f8] sm:$0xff] %vm1752, %v1664
    %1971 = vst [vmem:[%s2 + $0x700] sm:$0xff] %v653
    %1972 = vst [vmem:[%s2 + $0x708] sm:$0xff] %v822
    %1973 = vst [vmem:[%s2 + $0x710] sm:$0xff] %v991
    %1974 = vst [vmem:[%s2 + $0x718] sm:$0xff] %v1160
    %1975 = vst [vmem:[%s2 + $0x720] sm:$0xff] %v1329
    %1976 = vst [vmem:[%s2 + $0x728] sm:$0xff] %v1498
    %1977 = vst.msk [vmem:[%s2 + $0x730] sm:$0xff] %vm1752, %v1667
    %1978 = vst [vmem:[%s2 + $0x738] sm:$0xff] %v655
    %1979 = vst [vmem:[%s2 + $0x740] sm:$0xff] %v824
    %1980 = vst [vmem:[%s2 + $0x748] sm:$0xff] %v993
    %1981 = vst [vmem:[%s2 + $0x750] sm:$0xff] %v1162
    %1982 = vst [vmem:[%s2 + $0x758] sm:$0xff] %v1331
    %1983 = vst [vmem:[%s2 + $0x760] sm:$0xff] %v1500
    %1984 = vst.msk [vmem:[%s2 + $0x768] sm:$0xff] %vm1752, %v1669
    %1985 = vst [vmem:[%s2 + $0x770] sm:$0xff] %v658
    %1986 = vst [vmem:[%s2 + $0x778] sm:$0xff] %v827
    %1987 = vst [vmem:[%s2 + $0x780] sm:$0xff] %v996
    %1988 = vst [vmem:[%s2 + $0x788] sm:$0xff] %v1165
    %1989 = vst [vmem:[%s2 + $0x790] sm:$0xff] %v1334
    %1990 = vst [vmem:[%s2 + $0x798] sm:$0xff] %v1503
    %1991 = vst.msk [vmem:[%s2 + $0x7a0] sm:$0xff] %vm1752, %v1672
    %1992 = vst [vmem:[%s2 + $0x7a8] sm:$0xff] %v660
    %1993 = vst [vmem:[%s2 + $0x7b0] sm:$0xff] %v829
    %1994 = vst [vmem:[%s2 + $0x7b8] sm:$0xff] %v998
    %1995 = vst [vmem:[%s2 + $0x7c0] sm:$0xff] %v1167
    %1996 = vst [vmem:[%s2 + $0x7c8] sm:$0xff] %v1336
    %1997 = vst [vmem:[%s2 + $0x7d0] sm:$0xff] %v1505
    %1998 = vst.msk [vmem:[%s2 + $0x7d8] sm:$0xff] %vm1752, %v1674
    %1999 = vst [vmem:[%s2 + $0x7e0] sm:$0xff] %v663
    %2000 = vst [vmem:[%s2 + $0x7e8] sm:$0xff] %v832
    %2001 = vst [vmem:[%s2 + $0x7f0] sm:$0xff] %v1001
    %2002 = vst [vmem:[%s2 + $0x7f8] sm:$0xff] %v1170
    %2003 = vst [vmem:[%s2 + $0x800] sm:$0xff] %v1339
    %2004 = vst [vmem:[%s2 + $0x808] sm:$0xff] %v1508
    %2005 = vst.msk [vmem:[%s2 + $0x810] sm:$0xff] %vm1752, %v1677
    %2006 = vst [vmem:[%s2 + $0x818] sm:$0xff] %v665
    %2007 = vst [vmem:[%s2 + $0x820] sm:$0xff] %v834
    %2008 = vst [vmem:[%s2 + $0x828] sm:$0xff] %v1003
    %2009 = vst [vmem:[%s2 + $0x830] sm:$0xff] %v1172
    %2010 = vst [vmem:[%s2 + $0x838] sm:$0xff] %v1341
    %2011 = vst [vmem:[%s2 + $0x840] sm:$0xff] %v1510
    %2012 = vst.msk [vmem:[%s2 + $0x848] sm:$0xff] %vm1752, %v1679
    %2013 = vst [vmem:[%s2 + $0x850] sm:$0xff] %v668
    %2014 = vst [vmem:[%s2 + $0x858] sm:$0xff] %v837
    %2015 = vst [vmem:[%s2 + $0x860] sm:$0xff] %v1006
    %2016 = vst [vmem:[%s2 + $0x868] sm:$0xff] %v1175
    %2017 = vst [vmem:[%s2 + $0x870] sm:$0xff] %v1344
    %2018 = vst [vmem:[%s2 + $0x878] sm:$0xff] %v1513
    %2019 = vst.msk [vmem:[%s2 + $0x880] sm:$0xff] %vm1752, %v1682
    %2020 = vst [vmem:[%s2 + $0x888] sm:$0xff] %v670
    %2021 = vst [vmem:[%s2 + $0x890] sm:$0xff] %v839
    %2022 = vst [vmem:[%s2 + $0x898] sm:$0xff] %v1008
    %2023 = vst [vmem:[%s2 + $0x8a0] sm:$0xff] %v1177
    %2024 = vst [vmem:[%s2 + $0x8a8] sm:$0xff] %v1346
    %2025 = vst [vmem:[%s2 + $0x8b0] sm:$0xff] %v1515
    %2026 = vst.msk [vmem:[%s2 + $0x8b8] sm:$0xff] %vm1752, %v1684
    %2027 = vst [vmem:[%s2 + $0x8c0] sm:$0xff] %v673
    %2028 = vst [vmem:[%s2 + $0x8c8] sm:$0xff] %v842
    %2029 = vst [vmem:[%s2 + $0x8d0] sm:$0xff] %v1011
    %2030 = vst [vmem:[%s2 + $0x8d8] sm:$0xff] %v1180
    %2031 = vst [vmem:[%s2 + $0x8e0] sm:$0xff] %v1349
    %2032 = vst [vmem:[%s2 + $0x8e8] sm:$0xff] %v1518
    %2033 = vst.msk [vmem:[%s2 + $0x8f0] sm:$0xff] %vm1752, %v1687
    %2034 = vst [vmem:[%s2 + $0x8f8] sm:$0xff] %v675
    %2035 = vst [vmem:[%s2 + $0x900] sm:$0xff] %v844
    %2036 = vst [vmem:[%s2 + $0x908] sm:$0xff] %v1013
    %2037 = vst [vmem:[%s2 + $0x910] sm:$0xff] %v1182
    %2038 = vst [vmem:[%s2 + $0x918] sm:$0xff] %v1351
    %2039 = vst [vmem:[%s2 + $0x920] sm:$0xff] %v1520
    %2040 = vst.msk [vmem:[%s2 + $0x928] sm:$0xff] %vm1752, %v1689
    %2041 = vst [vmem:[%s2 + $0x930] sm:$0xff] %v678
    %2042 = vst [vmem:[%s2 + $0x938] sm:$0xff] %v847
    %2043 = vst [vmem:[%s2 + $0x940] sm:$0xff] %v1016
    %2044 = vst [vmem:[%s2 + $0x948] sm:$0xff] %v1185
    %2045 = vst [vmem:[%s2 + $0x950] sm:$0xff] %v1354
    %2046 = vst [vmem:[%s2 + $0x958] sm:$0xff] %v1523
    %2047 = vst.msk [vmem:[%s2 + $0x960] sm:$0xff] %vm1752, %v1692
    %2048 = vst [vmem:[%s2 + $0x968] sm:$0xff] %v680
    %2049 = vst [vmem:[%s2 + $0x970] sm:$0xff] %v849
    %2050 = vst [vmem:[%s2 + $0x978] sm:$0xff] %v1018
    %2051 = vst [vmem:[%s2 + $0x980] sm:$0xff] %v1187
    %2052 = vst [vmem:[%s2 + $0x988] sm:$0xff] %v1356
    %2053 = vst [vmem:[%s2 + $0x990] sm:$0xff] %v1525
    %2054 = vst.msk [vmem:[%s2 + $0x998] sm:$0xff] %vm1752, %v1694
    %2055 = vst [vmem:[%s2 + $0x9a0] sm:$0xff] %v683
    %2056 = vst [vmem:[%s2 + $0x9a8] sm:$0xff] %v852
    %2057 = vst [vmem:[%s2 + $0x9b0] sm:$0xff] %v1021
    %2058 = vst [vmem:[%s2 + $0x9b8] sm:$0xff] %v1190
    %2059 = vst [vmem:[%s2 + $0x9c0] sm:$0xff] %v1359
    %2060 = vst [vmem:[%s2 + $0x9c8] sm:$0xff] %v1528
    %2061 = vst.msk [vmem:[%s2 + $0x9d0] sm:$0xff] %vm1752, %v1697
    %2062 = vst [vmem:[%s2 + $0x9d8] sm:$0xff] %v685
    %2063 = vst [vmem:[%s2 + $0x9e0] sm:$0xff] %v854
    %2064 = vst [vmem:[%s2 + $0x9e8] sm:$0xff] %v1023
    %2065 = vst [vmem:[%s2 + $0x9f0] sm:$0xff] %v1192
    %2066 = vst [vmem:[%s2 + $0x9f8] sm:$0xff] %v1361
    %2067 = vst [vmem:[%s2 + $0xa00] sm:$0xff] %v1530
    %2068 = vst.msk [vmem:[%s2 + $0xa08] sm:$0xff] %vm1752, %v1699
    %2069 = vst [vmem:[%s2 + $0xa10] sm:$0xff] %v688
    %2070 = vst [vmem:[%s2 + $0xa18] sm:$0xff] %v857
    %2071 = vst [vmem:[%s2 + $0xa20] sm:$0xff] %v1026
    %2072 = vst [vmem:[%s2 + $0xa28] sm:$0xff] %v1195
    %2073 = vst [vmem:[%s2 + $0xa30] sm:$0xff] %v1364
    %2074 = vst [vmem:[%s2 + $0xa38] sm:$0xff] %v1533
    %2075 = vst.msk [vmem:[%s2 + $0xa40] sm:$0xff] %vm1752, %v1702
    %2076 = vst [vmem:[%s2 + $0xa48] sm:$0xff] %v690
    %2077 = vst [vmem:[%s2 + $0xa50] sm:$0xff] %v859
    %2078 = vst [vmem:[%s2 + $0xa58] sm:$0xff] %v1028
    %2079 = vst [vmem:[%s2 + $0xa60] sm:$0xff] %v1197
    %2080 = vst [vmem:[%s2 + $0xa68] sm:$0xff] %v1366
    %2081 = vst [vmem:[%s2 + $0xa70] sm:$0xff] %v1535
    %2082 = vst.msk [vmem:[%s2 + $0xa78] sm:$0xff] %vm1752, %v1704
    %2083 = vst [vmem:[%s2 + $0xa80] sm:$0xff] %v693
    %2084 = vst [vmem:[%s2 + $0xa88] sm:$0xff] %v862
    %2085 = vst [vmem:[%s2 + $0xa90] sm:$0xff] %v1031
    %2086 = vst [vmem:[%s2 + $0xa98] sm:$0xff] %v1200
    %2087 = vst [vmem:[%s2 + $0xaa0] sm:$0xff] %v1369
    %2088 = vst [vmem:[%s2 + $0xaa8] sm:$0xff] %v1538
    %2089 = vst.msk [vmem:[%s2 + $0xab0] sm:$0xff] %vm1752, %v1707
    %2090 = vst [vmem:[%s2 + $0xab8] sm:$0xff] %v695
    %2091 = vst [vmem:[%s2 + $0xac0] sm:$0xff] %v864
    %2092 = vst [vmem:[%s2 + $0xac8] sm:$0xff] %v1033
    %2093 = vst [vmem:[%s2 + $0xad0] sm:$0xff] %v1202
    %2094 = vst [vmem:[%s2 + $0xad8] sm:$0xff] %v1371
    %2095 = vst [vmem:[%s2 + $0xae0] sm:$0xff] %v1540
    %2096 = vst.msk [vmem:[%s2 + $0xae8] sm:$0xff] %vm1752, %v1709
    %2097 = vst [vmem:[%s2 + $0xaf0] sm:$0xff] %v698
    %2098 = vst [vmem:[%s2 + $0xaf8] sm:$0xff] %v867
    %2099 = vst [vmem:[%s2 + $0xb00] sm:$0xff] %v1036
    %2100 = vst [vmem:[%s2 + $0xb08] sm:$0xff] %v1205
    %2101 = vst [vmem:[%s2 + $0xb10] sm:$0xff] %v1374
    %2102 = vst [vmem:[%s2 + $0xb18] sm:$0xff] %v1543
    %2103 = vst.msk [vmem:[%s2 + $0xb20] sm:$0xff] %vm1752, %v1712
    %2104 = vst [vmem:[%s2 + $0xb28] sm:$0xff] %v700
    %2105 = vst [vmem:[%s2 + $0xb30] sm:$0xff] %v869
    %2106 = vst [vmem:[%s2 + $0xb38] sm:$0xff] %v1038
    %2107 = vst [vmem:[%s2 + $0xb40] sm:$0xff] %v1207
    %2108 = vst [vmem:[%s2 + $0xb48] sm:$0xff] %v1376
    %2109 = vst [vmem:[%s2 + $0xb50] sm:$0xff] %v1545
    %2110 = vst.msk [vmem:[%s2 + $0xb58] sm:$0xff] %vm1752, %v1714
    %2111 = vst [vmem:[%s2 + $0xb60] sm:$0xff] %v703
    %2112 = vst [vmem:[%s2 + $0xb68] sm:$0xff] %v872
    %2113 = vst [vmem:[%s2 + $0xb70] sm:$0xff] %v1041
    %2114 = vst [vmem:[%s2 + $0xb78] sm:$0xff] %v1210
    %2115 = vst [vmem:[%s2 + $0xb80] sm:$0xff] %v1379
    %2116 = vst [vmem:[%s2 + $0xb88] sm:$0xff] %v1548
    %2117 = vst.msk [vmem:[%s2 + $0xb90] sm:$0xff] %vm1752, %v1717
    %2118 = vst [vmem:[%s2 + $0xb98] sm:$0xff] %v705
    %2119 = vst [vmem:[%s2 + $0xba0] sm:$0xff] %v874
    %2120 = vst [vmem:[%s2 + $0xba8] sm:$0xff] %v1043
    %2121 = vst [vmem:[%s2 + $0xbb0] sm:$0xff] %v1212
    %2122 = vst [vmem:[%s2 + $0xbb8] sm:$0xff] %v1381
    %2123 = vst [vmem:[%s2 + $0xbc0] sm:$0xff] %v1550
    %2124 = vst.msk [vmem:[%s2 + $0xbc8] sm:$0xff] %vm1752, %v1719
    %2125 = vst [vmem:[%s2 + $0xbd0] sm:$0xff] %v708
    %2126 = vst [vmem:[%s2 + $0xbd8] sm:$0xff] %v877
    %2127 = vst [vmem:[%s2 + $0xbe0] sm:$0xff] %v1046
    %2128 = vst [vmem:[%s2 + $0xbe8] sm:$0xff] %v1215
    %2129 = vst [vmem:[%s2 + $0xbf0] sm:$0xff] %v1384
    %2130 = vst [vmem:[%s2 + $0xbf8] sm:$0xff] %v1553
    %2131 = vst.msk [vmem:[%s2 + $0xc00] sm:$0xff] %vm1752, %v1722
    %2132 = vst [vmem:[%s2 + $0xc08] sm:$0xff] %v710
    %2133 = vst [vmem:[%s2 + $0xc10] sm:$0xff] %v879
    %2134 = vst [vmem:[%s2 + $0xc18] sm:$0xff] %v1048
    %2135 = vst [vmem:[%s2 + $0xc20] sm:$0xff] %v1217
    %2136 = vst [vmem:[%s2 + $0xc28] sm:$0xff] %v1386
    %2137 = vst [vmem:[%s2 + $0xc30] sm:$0xff] %v1555
    %2138 = vst.msk [vmem:[%s2 + $0xc38] sm:$0xff] %vm1752, %v1724
    %2139 = vst [vmem:[%s2 + $0xc40] sm:$0xff] %v713
    %2140 = vst [vmem:[%s2 + $0xc48] sm:$0xff] %v882
    %2141 = vst [vmem:[%s2 + $0xc50] sm:$0xff] %v1051
    %2142 = vst [vmem:[%s2 + $0xc58] sm:$0xff] %v1220
    %2143 = vst [vmem:[%s2 + $0xc60] sm:$0xff] %v1389
    %2144 = vst [vmem:[%s2 + $0xc68] sm:$0xff] %v1558
    %2145 = vst.msk [vmem:[%s2 + $0xc70] sm:$0xff] %vm1752, %v1727
    %2146 = vst [vmem:[%s2 + $0xc78] sm:$0xff] %v715
    %2147 = vst [vmem:[%s2 + $0xc80] sm:$0xff] %v884
    %2148 = vst [vmem:[%s2 + $0xc88] sm:$0xff] %v1053
    %2149 = vst [vmem:[%s2 + $0xc90] sm:$0xff] %v1222
    %2150 = vst [vmem:[%s2 + $0xc98] sm:$0xff] %v1391
    %2151 = vst [vmem:[%s2 + $0xca0] sm:$0xff] %v1560
    %2152 = vst.msk [vmem:[%s2 + $0xca8] sm:$0xff] %vm1752, %v1729
    %2153 = vst [vmem:[%s2 + $0xcb0] sm:$0xff] %v718
    %2154 = vst [vmem:[%s2 + $0xcb8] sm:$0xff] %v887
    %2155 = vst [vmem:[%s2 + $0xcc0] sm:$0xff] %v1056
    %2156 = vst [vmem:[%s2 + $0xcc8] sm:$0xff] %v1225
    %2157 = vst [vmem:[%s2 + $0xcd0] sm:$0xff] %v1394
    %2158 = vst [vmem:[%s2 + $0xcd8] sm:$0xff] %v1563
    %2159 = vst.msk [vmem:[%s2 + $0xce0] sm:$0xff] %vm1752, %v1732
    %2160 = vst [vmem:[%s2 + $0xce8] sm:$0xff] %v720
    %2161 = vst [vmem:[%s2 + $0xcf0] sm:$0xff] %v889
    %2162 = vst [vmem:[%s2 + $0xcf8] sm:$0xff] %v1058
    %2163 = vst [vmem:[%s2 + $0xd00] sm:$0xff] %v1227
    %2164 = vst [vmem:[%s2 + $0xd08] sm:$0xff] %v1396
    %2165 = vst [vmem:[%s2 + $0xd10] sm:$0xff] %v1565
    %2166 = vst.msk [vmem:[%s2 + $0xd18] sm:$0xff] %vm1752, %v1734
    %2167 = vst [vmem:[%s2 + $0xd20] sm:$0xff] %v723
    %2168 = vst [vmem:[%s2 + $0xd28] sm:$0xff] %v892
    %2169 = vst [vmem:[%s2 + $0xd30] sm:$0xff] %v1061
    %2170 = vst [vmem:[%s2 + $0xd38] sm:$0xff] %v1230
    %2171 = vst [vmem:[%s2 + $0xd40] sm:$0xff] %v1399
    %2172 = vst [vmem:[%s2 + $0xd48] sm:$0xff] %v1568
    %2173 = vst.msk [vmem:[%s2 + $0xd50] sm:$0xff] %vm1752, %v1737
    %2174 = vst [vmem:[%s2 + $0xd58] sm:$0xff] %v725
    %2175 = vst [vmem:[%s2 + $0xd60] sm:$0xff] %v894
    %2176 = vst [vmem:[%s2 + $0xd68] sm:$0xff] %v1063
    %2177 = vst [vmem:[%s2 + $0xd70] sm:$0xff] %v1232
    %2178 = vst [vmem:[%s2 + $0xd78] sm:$0xff] %v1401
    %2179 = vst [vmem:[%s2 + $0xd80] sm:$0xff] %v1570
    %2180 = vst.msk [vmem:[%s2 + $0xd88] sm:$0xff] %vm1752, %v1739
    %2181 = vst [vmem:[%s2 + $0xd90] sm:$0xff] %v728
    %2182 = vst [vmem:[%s2 + $0xd98] sm:$0xff] %v897
    %2183 = vst [vmem:[%s2 + $0xda0] sm:$0xff] %v1066
    %2184 = vst [vmem:[%s2 + $0xda8] sm:$0xff] %v1235
    %2185 = vst [vmem:[%s2 + $0xdb0] sm:$0xff] %v1404
    %2186 = vst [vmem:[%s2 + $0xdb8] sm:$0xff] %v1573
    %2187 = vst.msk [vmem:[%s2 + $0xdc0] sm:$0xff] %vm1752, %v1742
    %2188 = vst [vmem:[%s2 + $0xdc8] sm:$0xff] %v730
    %2189 = vst [vmem:[%s2 + $0xdd0] sm:$0xff] %v899
    %2190 = vst [vmem:[%s2 + $0xdd8] sm:$0xff] %v1068
    %2191 = vst [vmem:[%s2 + $0xde0] sm:$0xff] %v1237
    %2192 = vst [vmem:[%s2 + $0xde8] sm:$0xff] %v1406
    %2193 = vst [vmem:[%s2 + $0xdf0] sm:$0xff] %v1575
    %2194 = vst.msk [vmem:[%s2 + $0xdf8] sm:$0xff] %vm1752, %v1744
    // Predicated region
    $region14: #{tpu_custom_call.1} parent=1 // pred_check
      _
    $region15: #{tpu_custom_call.1} parent=1 // pred_check_branch
      %2196 = sbr.rel (0) target = $region17
    $region16: #{tpu_custom_call.1} parent=1 // pred_region
      _
    $region17: #{tpu_custom_call.1} parent=1 // pred_fallthru
      _
    // Predicated region
    $region18: #{tpu_custom_call.1} parent=1 // pred_check
      _
    $region19: #{tpu_custom_call.1} parent=1 // pred_check_branch
      %2198 = sbr.rel (0) target = $region21
    $region20: #{tpu_custom_call.1} parent=1 // pred_region
      _
    $region21: #{tpu_custom_call.1} parent=1 // pred_fallthru
      _
    %2199 = vsyncpa [#allocation3], 1

</llo_original>
